<compile_context>
chip_gen: v5e
topology: v5e:2x2
jax: 0.10.0
libtpu: 0.0.40
codegen_flags: <defaults>
</compile_context>

<pallas_src>
import functools

import numpy as np
import jax
import jax.numpy as jnp
from jax import lax
from jax.experimental import pallas as pl
from jax.experimental.pallas import tpu as pltpu


def _pick_chunk(n, candidates):
    """Largest candidate that evenly divides n (falls back to 1)."""
    for c in candidates:
        if n % c == 0:
            return c
    return 1


# ----------------------------------------------------------------------------
# Kernel 1: bidirectional LSTM recurrence, chunked over time.
# Grid is (T // TC,), sequential ("arbitrary"). h/c for both directions live in
# VMEM scratch and carry across grid steps. The same flattened input is passed
# twice: once at chunk ci (forward) and once at chunk Tc-1-ci (backward).
# ----------------------------------------------------------------------------
def _bilstm_kernel(xf_ref, xb_ref,
                   wih_f_ref, whh_f_ref, b_f_ref,
                   wih_b_ref, whh_b_ref, b_b_ref,
                   out_f_ref, out_b_ref,
                   h_f, c_f, h_b, c_b,
                   *, hidden, tc, bp):
    H = hidden

    @pl.when(pl.program_id(0) == 0)
    def _():
        h_f[...] = jnp.zeros_like(h_f)
        c_f[...] = jnp.zeros_like(c_f)
        h_b[...] = jnp.zeros_like(h_b)
        c_b[...] = jnp.zeros_like(c_b)

    # Chunk-level input projection (hoisted off the serial per-step path);
    # the combined bias (b_ih + b_hh) is folded in here so the recurrent step
    # below is just gx[t] + h @ Whh.
    gx_f = jnp.dot(xf_ref[...], wih_f_ref[...],
                   preferred_element_type=jnp.float32) + b_f_ref[...]
    gx_b = jnp.dot(xb_ref[...], wih_b_ref[...],
                   preferred_element_type=jnp.float32) + b_b_ref[...]

    def cell(pre, c):
        i = jax.nn.sigmoid(pre[:, 0 * H:1 * H])
        f = jax.nn.sigmoid(pre[:, 1 * H:2 * H])
        g = jnp.tanh(pre[:, 2 * H:3 * H])
        o = jax.nn.sigmoid(pre[:, 3 * H:4 * H])
        c_new = f * c + i * g
        h_new = o * jnp.tanh(c_new)
        return h_new, c_new

    hf, cf = h_f[...], c_f[...]
    hb, cb = h_b[...], c_b[...]

    # Static (fully unrolled) loop over the TC timesteps of this chunk.
    for j in range(tc):
        # forward direction: local time j  (global time ci*TC + j)
        pre_f = gx_f[j * bp:(j + 1) * bp, :] + jnp.dot(
            hf, whh_f_ref[...], preferred_element_type=jnp.float32)
        hf, cf = cell(pre_f, cf)
        out_f_ref[j * bp:(j + 1) * bp, :] = hf

        # backward direction: this chunk holds reversed-time block Tc-1-ci;
        # global time = T-1-(ci*TC + j) -> local index TC-1-j.
        jb = tc - 1 - j
        pre_b = gx_b[jb * bp:(jb + 1) * bp, :] + jnp.dot(
            hb, whh_b_ref[...], preferred_element_type=jnp.float32)
        hb, cb = cell(pre_b, cb)
        out_b_ref[jb * bp:(jb + 1) * bp, :] = hb

    h_f[...] = hf
    c_f[...] = cf
    h_b[...] = hb
    c_b[...] = cb


# ----------------------------------------------------------------------------
# Kernel 2: embedding Linear, consuming forward/backward halves directly
# (no concat):  out = f @ W[:H] + b @ W[H:] + bias.   Row-tiled, parallel.
# ----------------------------------------------------------------------------
def _linear_kernel(f_ref, b_ref, wf_ref, wb_ref, bias_ref, o_ref):
    o_ref[...] = (
        jnp.dot(f_ref[...], wf_ref[...], preferred_element_type=jnp.float32)
        + jnp.dot(b_ref[...], wb_ref[...], preferred_element_type=jnp.float32)
        + bias_ref[...])


def bidirectional_lstm(x, params):
    T, B, nIn = x.shape
    H = params["whh_f"].shape[0]          # whh_f: (H, 4H)
    nOut = params["w_emb"].shape[1]        # w_emb: (2H, nOut)
    dt = jnp.float32

    # Sublane-dense batch: pad B up to a multiple of 8 (padded rows are zeros;
    # their LSTM outputs are discarded at the end — rows never interact).
    Bp = max(8, ((B + 7) // 8) * 8)
    if Bp != B:
        x = jnp.pad(x, ((0, 0), (0, Bp - B), (0, 0)))
    x2 = x.reshape(T * Bp, nIn)            # flattened seq-major layout

    TC = _pick_chunk(T, (16, 8, 4, 2, 1))  # timesteps per grid step
    Tc = T // TC
    rows = TC * Bp                         # rows of the flattened chunk

    out_f, out_b = pl.pallas_call(
        functools.partial(_bilstm_kernel, hidden=H, tc=TC, bp=Bp),
        out_shape=(jax.ShapeDtypeStruct((T * Bp, H), dt),
                   jax.ShapeDtypeStruct((T * Bp, H), dt)),
        grid_spec=pltpu.PrefetchScalarGridSpec(
            num_scalar_prefetch=0,
            grid=(Tc,),
            in_specs=[
                pl.BlockSpec((rows, nIn), lambda ci: (ci, 0)),           # x (fwd chunk)
                pl.BlockSpec((rows, nIn), lambda ci: (Tc - 1 - ci, 0)),  # x (bwd chunk)
                pl.BlockSpec((nIn, 4 * H), lambda ci: (0, 0)),
                pl.BlockSpec((H, 4 * H), lambda ci: (0, 0)),
                pl.BlockSpec((1, 4 * H), lambda ci: (0, 0)),
                pl.BlockSpec((nIn, 4 * H), lambda ci: (0, 0)),
                pl.BlockSpec((H, 4 * H), lambda ci: (0, 0)),
                pl.BlockSpec((1, 4 * H), lambda ci: (0, 0)),
            ],
            out_specs=[
                pl.BlockSpec((rows, H), lambda ci: (ci, 0)),
                pl.BlockSpec((rows, H), lambda ci: (Tc - 1 - ci, 0)),
            ],
            scratch_shapes=[pltpu.VMEM((Bp, H), dt)] * 4,   # h_f, c_f, h_b, c_b
        ),
        compiler_params=pltpu.CompilerParams(
            dimension_semantics=("arbitrary",)),
    )(x2, x2,
      params["wih_f"], params["whh_f"], params["b_f"],
      params["wih_b"], params["whh_b"], params["b_b"])

    # Embedding Linear — no concat/reshape HBM round trip; split the weight
    # into its forward/backward halves instead.
    w_f = params["w_emb"][:H]
    w_b = params["w_emb"][H:]
    ROWS = _pick_chunk(T * Bp, (512, 256, 128, 64, 32, 16, 8))
    emb = pl.pallas_call(
        _linear_kernel,
        out_shape=jax.ShapeDtypeStruct((T * Bp, nOut), dt),
        grid=(T * Bp // ROWS,),
        in_specs=[
            pl.BlockSpec((ROWS, H), lambda i: (i, 0)),
            pl.BlockSpec((ROWS, H), lambda i: (i, 0)),
            pl.BlockSpec((H, nOut), lambda i: (0, 0)),
            pl.BlockSpec((H, nOut), lambda i: (0, 0)),
            pl.BlockSpec((1, nOut), lambda i: (0, 0)),
        ],
        out_specs=pl.BlockSpec((ROWS, nOut), lambda i: (i, 0)),
        compiler_params=pltpu.CompilerParams(
            dimension_semantics=("parallel",)),
    )(out_f, out_b, w_f, w_b, params["b_emb"])

    return emb.reshape(T, Bp, nOut)[:, :B, :]


# ----------------------------------------------------------------------------
# Pure-JAX reference (mirrors PyTorch semantics) for numerical verification.
# ----------------------------------------------------------------------------
def ref_forward(x, params):
    T, B, _ = x.shape
    H = params["whh_f"].shape[0]

    def cell(carry, xt, wih, whh, b):
        h, c = carry
        g = xt @ wih + h @ whh + b
        i = jax.nn.sigmoid(g[:, :H])
        f = jax.nn.sigmoid(g[:, H:2 * H])
        gg = jnp.tanh(g[:, 2 * H:3 * H])
        o = jax.nn.sigmoid(g[:, 3 * H:])
        c = f * c + i * gg
        h = o * jnp.tanh(c)
        return (h, c), h

    init = (jnp.zeros((B, H), jnp.float32), jnp.zeros((B, H), jnp.float32))
    _, hs_f = lax.scan(
        lambda cr, xt: cell(cr, xt, params["wih_f"], params["whh_f"], params["b_f"]),
        init, x)
    _, hs_b = lax.scan(
        lambda cr, xt: cell(cr, xt, params["wih_b"], params["whh_b"], params["b_b"]),
        init, x[::-1])
    hs_b = hs_b[::-1]
    rec = jnp.concatenate([hs_f, hs_b], axis=-1)
    out = rec.reshape(T * B, 2 * H) @ params["w_emb"] + params["b_emb"]
    return out.reshape(T, B, -1)


def init_params(key, nIn, nHidden, nOut):
    """Deterministic init matching PyTorch shapes (weights stored pre-transposed)."""
    ks = jax.random.split(key, 11)
    k_lstm = 1.0 / np.sqrt(nHidden)
    k_lin = 1.0 / np.sqrt(2 * nHidden)

    def u(k, shape, scale):
        return jax.random.uniform(k, shape, jnp.float32, -scale, scale)

    params = {
        # forward direction: weight_ih (4H, nIn) -> stored (nIn, 4H), etc.
        "wih_f": u(ks[0], (nIn, 4 * nHidden), k_lstm),
        "whh_f": u(ks[1], (nHidden, 4 * nHidden), k_lstm),
        "b_f": (u(ks[2], (1, 4 * nHidden), k_lstm)
                + u(ks[3], (1, 4 * nHidden), k_lstm)),  # bias_ih + bias_hh
        # backward direction
        "wih_b": u(ks[4], (nIn, 4 * nHidden), k_lstm),
        "whh_b": u(ks[5], (nHidden, 4 * nHidden), k_lstm),
        "b_b": (u(ks[6], (1, 4 * nHidden), k_lstm)
                + u(ks[7], (1, 4 * nHidden), k_lstm)),
        # embedding Linear: weight (nOut, 2H) -> stored (2H, nOut)
        "w_emb": u(ks[8], (2 * nHidden, nOut), k_lin),
        "b_emb": u(ks[9], (1, nOut), k_lin),
    }
    return params


if __name__ == "__main__":
    T, B, nIn, nHidden, nOut = 8, 2, 16, 32, 10

    key = jax.random.PRNGKey(0)
    k_x, k_p = jax.random.split(key)
    x = jax.random.normal(k_x, (T, B, nIn), jnp.float32)
    params = init_params(k_p, nIn, nHidden, nOut)

    out = jax.block_until_ready(bidirectional_lstm(x, params))
    ref = jax.block_until_ready(ref_forward(x, params))

    assert out.shape == (T, B, nOut), out.shape
    np.testing.assert_allclose(np.asarray(out), np.asarray(ref),
                               rtol=1e-4, atol=1e-4)
    print("KERNEL_OK")
</pallas_src>

<mosaic_0001>
module attributes {stable_mosaic.version = 11 : i64} {
  func.func @_bilstm_kernel(%arg0: i32, %arg1: memref<64x16xf32, #tpu.memory_space<vmem>>, %arg2: memref<64x16xf32, #tpu.memory_space<vmem>>, %arg3: memref<16x128xf32, #tpu.memory_space<vmem>>, %arg4: memref<32x128xf32, #tpu.memory_space<vmem>>, %arg5: memref<1x128xf32, #tpu.memory_space<vmem>>, %arg6: memref<16x128xf32, #tpu.memory_space<vmem>>, %arg7: memref<32x128xf32, #tpu.memory_space<vmem>>, %arg8: memref<1x128xf32, #tpu.memory_space<vmem>>, %arg9: memref<64x32xf32, #tpu.memory_space<vmem>>, %arg10: memref<64x32xf32, #tpu.memory_space<vmem>>, %arg11: memref<8x32xf32, #tpu.memory_space<vmem>>, %arg12: memref<8x32xf32, #tpu.memory_space<vmem>>, %arg13: memref<8x32xf32, #tpu.memory_space<vmem>>, %arg14: memref<8x32xf32, #tpu.memory_space<vmem>>) attributes {dimension_semantics = [#tpu.dimension_semantics<arbitrary>], iteration_bounds = array<i64: 1>, scalar_prefetch = 0 : i64, scratch_operands = 4 : i64, tpu.core_type = #tpu.core_type<tc>, window_params = [{transform_indices = @transform_0, window_bounds = array<i64: 64, 16>}, {transform_indices = @transform_1, window_bounds = array<i64: 64, 16>}, {pipeline_mode = #tpu.pipeline_mode<synchronous>, transform_indices = @transform_2, window_bounds = array<i64: 16, 128>}, {pipeline_mode = #tpu.pipeline_mode<synchronous>, transform_indices = @transform_3, window_bounds = array<i64: 32, 128>}, {pipeline_mode = #tpu.pipeline_mode<synchronous>, transform_indices = @transform_4, window_bounds = array<i64: 1, 128>}, {pipeline_mode = #tpu.pipeline_mode<synchronous>, transform_indices = @transform_5, window_bounds = array<i64: 16, 128>}, {pipeline_mode = #tpu.pipeline_mode<synchronous>, transform_indices = @transform_6, window_bounds = array<i64: 32, 128>}, {pipeline_mode = #tpu.pipeline_mode<synchronous>, transform_indices = @transform_7, window_bounds = array<i64: 1, 128>}, {transform_indices = @transform_8, window_bounds = array<i64: 64, 32>}, {transform_indices = @transform_9, window_bounds = array<i64: 64, 32>}]} {
    %c0_i32 = arith.constant 0 : i32
    %0 = arith.cmpi eq, %arg0, %c0_i32 : i32
    %1 = arith.extui %0 : i1 to i32
    %c0_i32_0 = arith.constant 0 : i32
    %2 = arith.cmpi ne, %1, %c0_i32_0 : i32
    scf.if %2 {
      %cst_150 = arith.constant 0.000000e+00 : f32
      %503 = vector.broadcast %cst_150 : f32 to vector<8x32xf32>
      %c0_151 = arith.constant 0 : index
      %c0_152 = arith.constant 0 : index
      %504 = vector.load %arg11[%c0_151, %c0_152] : memref<8x32xf32, #tpu.memory_space<vmem>>, vector<8x32xf32>
      tpu.vector_store %arg11[%c0_151, %c0_152], %503 {strides = array<i32>} : memref<8x32xf32, #tpu.memory_space<vmem>>, vector<8x32xf32>,
      %cst_153 = arith.constant 0.000000e+00 : f32
      %505 = vector.broadcast %cst_153 : f32 to vector<8x32xf32>
      %c0_154 = arith.constant 0 : index
      %c0_155 = arith.constant 0 : index
      %506 = vector.load %arg12[%c0_154, %c0_155] : memref<8x32xf32, #tpu.memory_space<vmem>>, vector<8x32xf32>
      tpu.vector_store %arg12[%c0_154, %c0_155], %505 {strides = array<i32>} : memref<8x32xf32, #tpu.memory_space<vmem>>, vector<8x32xf32>,
      %cst_156 = arith.constant 0.000000e+00 : f32
      %507 = vector.broadcast %cst_156 : f32 to vector<8x32xf32>
      %c0_157 = arith.constant 0 : index
      %c0_158 = arith.constant 0 : index
      %508 = vector.load %arg13[%c0_157, %c0_158] : memref<8x32xf32, #tpu.memory_space<vmem>>, vector<8x32xf32>
      tpu.vector_store %arg13[%c0_157, %c0_158], %507 {strides = array<i32>} : memref<8x32xf32, #tpu.memory_space<vmem>>, vector<8x32xf32>,
      %cst_159 = arith.constant 0.000000e+00 : f32
      %509 = vector.broadcast %cst_159 : f32 to vector<8x32xf32>
      %c0_160 = arith.constant 0 : index
      %c0_161 = arith.constant 0 : index
      %510 = vector.load %arg14[%c0_160, %c0_161] : memref<8x32xf32, #tpu.memory_space<vmem>>, vector<8x32xf32>
      tpu.vector_store %arg14[%c0_160, %c0_161], %509 {strides = array<i32>} : memref<8x32xf32, #tpu.memory_space<vmem>>, vector<8x32xf32>,
    } else {
    }
    %c0 = arith.constant 0 : index
    %c0_1 = arith.constant 0 : index
    %3 = vector.load %arg1[%c0, %c0_1] : memref<64x16xf32, #tpu.memory_space<vmem>>, vector<64x16xf32>
    %c0_2 = arith.constant 0 : index
    %c0_3 = arith.constant 0 : index
    %4 = vector.load %arg3[%c0_2, %c0_3] : memref<16x128xf32, #tpu.memory_space<vmem>>, vector<16x128xf32>
    %cst = arith.constant dense<0.000000e+00> : vector<64x128xf32>
    %5 = tpu.matmul %3, %4, %cst {dimension_numbers = #tpu.dot_dimension_numbers<[1], [0], [0], [1], [0, 0, 1, 1], [], []>} : vector<64x16xf32>, vector<16x128xf32>, vector<64x128xf32> -> vector<64x128xf32>
    %c0_4 = arith.constant 0 : index
    %c0_5 = arith.constant 0 : index
    %6 = vector.load %arg5[%c0_4, %c0_5] : memref<1x128xf32, #tpu.memory_space<vmem>>, vector<1x128xf32>
    %7 = vector.broadcast %6 : vector<1x128xf32> to vector<64x128xf32>
    %8 = arith.addf %5, %7 : vector<64x128xf32>
    %c0_6 = arith.constant 0 : index
    %c0_7 = arith.constant 0 : index
    %9 = vector.load %arg2[%c0_6, %c0_7] : memref<64x16xf32, #tpu.memory_space<vmem>>, vector<64x16xf32>
    %c0_8 = arith.constant 0 : index
    %c0_9 = arith.constant 0 : index
    %10 = vector.load %arg6[%c0_8, %c0_9] : memref<16x128xf32, #tpu.memory_space<vmem>>, vector<16x128xf32>
    %cst_10 = arith.constant dense<0.000000e+00> : vector<64x128xf32>
    %11 = tpu.matmul %9, %10, %cst_10 {dimension_numbers = #tpu.dot_dimension_numbers<[1], [0], [0], [1], [0, 0, 1, 1], [], []>} : vector<64x16xf32>, vector<16x128xf32>, vector<64x128xf32> -> vector<64x128xf32>
    %c0_11 = arith.constant 0 : index
    %c0_12 = arith.constant 0 : index
    %12 = vector.load %arg8[%c0_11, %c0_12] : memref<1x128xf32, #tpu.memory_space<vmem>>, vector<1x128xf32>
    %13 = vector.broadcast %12 : vector<1x128xf32> to vector<64x128xf32>
    %14 = arith.addf %11, %13 : vector<64x128xf32>
    %c0_13 = arith.constant 0 : index
    %c0_14 = arith.constant 0 : index
    %15 = vector.load %arg11[%c0_13, %c0_14] : memref<8x32xf32, #tpu.memory_space<vmem>>, vector<8x32xf32>
    %c0_15 = arith.constant 0 : index
    %c0_16 = arith.constant 0 : index
    %16 = vector.load %arg12[%c0_15, %c0_16] : memref<8x32xf32, #tpu.memory_space<vmem>>, vector<8x32xf32>
    %c0_17 = arith.constant 0 : index
    %c0_18 = arith.constant 0 : index
    %17 = vector.load %arg13[%c0_17, %c0_18] : memref<8x32xf32, #tpu.memory_space<vmem>>, vector<8x32xf32>
    %c0_19 = arith.constant 0 : index
    %c0_20 = arith.constant 0 : index
    %18 = vector.load %arg14[%c0_19, %c0_20] : memref<8x32xf32, #tpu.memory_space<vmem>>, vector<8x32xf32>
    %19 = vector.extract_strided_slice %8 {offsets = [0, 0], sizes = [8, 128], strides = [1, 1]} : vector<64x128xf32> to vector<8x128xf32>
    %c0_21 = arith.constant 0 : index
    %c0_22 = arith.constant 0 : index
    %20 = vector.load %arg4[%c0_21, %c0_22] : memref<32x128xf32, #tpu.memory_space<vmem>>, vector<32x128xf32>
    %cst_23 = arith.constant dense<0.000000e+00> : vector<8x128xf32>
    %21 = tpu.matmul %15, %20, %cst_23 {dimension_numbers = #tpu.dot_dimension_numbers<[1], [0], [0], [1], [0, 0, 1, 1], [], []>} : vector<8x32xf32>, vector<32x128xf32>, vector<8x128xf32> -> vector<8x128xf32>
    %22 = arith.addf %19, %21 : vector<8x128xf32>
    %23 = vector.extract_strided_slice %22 {offsets = [0, 0], sizes = [8, 32], strides = [1, 1]} : vector<8x128xf32> to vector<8x32xf32>
    %24 = arith.negf %23 : vector<8x32xf32>
    %25 = math.exp %24 : vector<8x32xf32>
    %cst_24 = arith.constant 1.000000e+00 : f32
    %26 = vector.broadcast %cst_24 : f32 to vector<8x32xf32>
    %27 = arith.addf %26, %25 : vector<8x32xf32>
    %28 = arith.divf %26, %27 : vector<8x32xf32>
    %29 = vector.extract_strided_slice %22 {offsets = [0, 32], sizes = [8, 32], strides = [1, 1]} : vector<8x128xf32> to vector<8x32xf32>
    %30 = arith.negf %29 : vector<8x32xf32>
    %31 = math.exp %30 : vector<8x32xf32>
    %cst_25 = arith.constant 1.000000e+00 : f32
    %32 = vector.broadcast %cst_25 : f32 to vector<8x32xf32>
    %33 = arith.addf %32, %31 : vector<8x32xf32>
    %34 = arith.divf %32, %33 : vector<8x32xf32>
    %35 = vector.extract_strided_slice %22 {offsets = [0, 64], sizes = [8, 32], strides = [1, 1]} : vector<8x128xf32> to vector<8x32xf32>
    %36 = math.tanh %35 : vector<8x32xf32>
    %37 = vector.extract_strided_slice %22 {offsets = [0, 96], sizes = [8, 32], strides = [1, 1]} : vector<8x128xf32> to vector<8x32xf32>
    %38 = arith.negf %37 : vector<8x32xf32>
    %39 = math.exp %38 : vector<8x32xf32>
    %cst_26 = arith.constant 1.000000e+00 : f32
    %40 = vector.broadcast %cst_26 : f32 to vector<8x32xf32>
    %41 = arith.addf %40, %39 : vector<8x32xf32>
    %42 = arith.divf %40, %41 : vector<8x32xf32>
    %43 = arith.mulf %34, %16 : vector<8x32xf32>
    %44 = arith.mulf %28, %36 : vector<8x32xf32>
    %45 = arith.addf %43, %44 : vector<8x32xf32>
    %46 = math.tanh %45 : vector<8x32xf32>
    %47 = arith.mulf %42, %46 : vector<8x32xf32>
    %c0_27 = arith.constant 0 : index
    %c0_28 = arith.constant 0 : index
    %48 = vector.load %arg9[%c0_27, %c0_28] : memref<64x32xf32, #tpu.memory_space<vmem>>, vector<8x32xf32>
    tpu.vector_store %arg9[%c0_27, %c0_28], %47 {strides = array<i32>} : memref<64x32xf32, #tpu.memory_space<vmem>>, vector<8x32xf32>,
    %49 = vector.extract_strided_slice %14 {offsets = [56, 0], sizes = [8, 128], strides = [1, 1]} : vector<64x128xf32> to vector<8x128xf32>
    %c0_29 = arith.constant 0 : index
    %c0_30 = arith.constant 0 : index
    %50 = vector.load %arg7[%c0_29, %c0_30] : memref<32x128xf32, #tpu.memory_space<vmem>>, vector<32x128xf32>
    %cst_31 = arith.constant dense<0.000000e+00> : vector<8x128xf32>
    %51 = tpu.matmul %17, %50, %cst_31 {dimension_numbers = #tpu.dot_dimension_numbers<[1], [0], [0], [1], [0, 0, 1, 1], [], []>} : vector<8x32xf32>, vector<32x128xf32>, vector<8x128xf32> -> vector<8x128xf32>
    %52 = arith.addf %49, %51 : vector<8x128xf32>
    %53 = vector.extract_strided_slice %52 {offsets = [0, 0], sizes = [8, 32], strides = [1, 1]} : vector<8x128xf32> to vector<8x32xf32>
    %54 = arith.negf %53 : vector<8x32xf32>
    %55 = math.exp %54 : vector<8x32xf32>
    %cst_32 = arith.constant 1.000000e+00 : f32
    %56 = vector.broadcast %cst_32 : f32 to vector<8x32xf32>
    %57 = arith.addf %56, %55 : vector<8x32xf32>
    %58 = arith.divf %56, %57 : vector<8x32xf32>
    %59 = vector.extract_strided_slice %52 {offsets = [0, 32], sizes = [8, 32], strides = [1, 1]} : vector<8x128xf32> to vector<8x32xf32>
    %60 = arith.negf %59 : vector<8x32xf32>
    %61 = math.exp %60 : vector<8x32xf32>
    %cst_33 = arith.constant 1.000000e+00 : f32
    %62 = vector.broadcast %cst_33 : f32 to vector<8x32xf32>
    %63 = arith.addf %62, %61 : vector<8x32xf32>
    %64 = arith.divf %62, %63 : vector<8x32xf32>
    %65 = vector.extract_strided_slice %52 {offsets = [0, 64], sizes = [8, 32], strides = [1, 1]} : vector<8x128xf32> to vector<8x32xf32>
    %66 = math.tanh %65 : vector<8x32xf32>
    %67 = vector.extract_strided_slice %52 {offsets = [0, 96], sizes = [8, 32], strides = [1, 1]} : vector<8x128xf32> to vector<8x32xf32>
    %68 = arith.negf %67 : vector<8x32xf32>
    %69 = math.exp %68 : vector<8x32xf32>
    %cst_34 = arith.constant 1.000000e+00 : f32
    %70 = vector.broadcast %cst_34 : f32 to vector<8x32xf32>
    %71 = arith.addf %70, %69 : vector<8x32xf32>
    %72 = arith.divf %70, %71 : vector<8x32xf32>
    %73 = arith.mulf %64, %18 : vector<8x32xf32>
    %74 = arith.mulf %58, %66 : vector<8x32xf32>
    %75 = arith.addf %73, %74 : vector<8x32xf32>
    %76 = math.tanh %75 : vector<8x32xf32>
    %77 = arith.mulf %72, %76 : vector<8x32xf32>
    %c56 = arith.constant 56 : index
    %c0_35 = arith.constant 0 : index
    %78 = vector.load %arg10[%c56, %c0_35] : memref<64x32xf32, #tpu.memory_space<vmem>>, vector<8x32xf32>
    tpu.vector_store %arg10[%c56, %c0_35], %77 {strides = array<i32>} : memref<64x32xf32, #tpu.memory_space<vmem>>, vector<8x32xf32>,
    %79 = vector.extract_strided_slice %8 {offsets = [8, 0], sizes = [8, 128], strides = [1, 1]} : vector<64x128xf32> to vector<8x128xf32>
    %c0_36 = arith.constant 0 : index
    %c0_37 = arith.constant 0 : index
    %80 = vector.load %arg4[%c0_36, %c0_37] : memref<32x128xf32, #tpu.memory_space<vmem>>, vector<32x128xf32>
    %cst_38 = arith.constant dense<0.000000e+00> : vector<8x128xf32>
    %81 = tpu.matmul %47, %80, %cst_38 {dimension_numbers = #tpu.dot_dimension_numbers<[1], [0], [0], [1], [0, 0, 1, 1], [], []>} : vector<8x32xf32>, vector<32x128xf32>, vector<8x128xf32> -> vector<8x128xf32>
    %82 = arith.addf %79, %81 : vector<8x128xf32>
    %83 = vector.extract_strided_slice %82 {offsets = [0, 0], sizes = [8, 32], strides = [1, 1]} : vector<8x128xf32> to vector<8x32xf32>
    %84 = arith.negf %83 : vector<8x32xf32>
    %85 = math.exp %84 : vector<8x32xf32>
    %cst_39 = arith.constant 1.000000e+00 : f32
    %86 = vector.broadcast %cst_39 : f32 to vector<8x32xf32>
    %87 = arith.addf %86, %85 : vector<8x32xf32>
    %88 = arith.divf %86, %87 : vector<8x32xf32>
    %89 = vector.extract_strided_slice %82 {offsets = [0, 32], sizes = [8, 32], strides = [1, 1]} : vector<8x128xf32> to vector<8x32xf32>
    %90 = arith.negf %89 : vector<8x32xf32>
    %91 = math.exp %90 : vector<8x32xf32>
    %cst_40 = arith.constant 1.000000e+00 : f32
    %92 = vector.broadcast %cst_40 : f32 to vector<8x32xf32>
    %93 = arith.addf %92, %91 : vector<8x32xf32>
    %94 = arith.divf %92, %93 : vector<8x32xf32>
    %95 = vector.extract_strided_slice %82 {offsets = [0, 64], sizes = [8, 32], strides = [1, 1]} : vector<8x128xf32> to vector<8x32xf32>
    %96 = math.tanh %95 : vector<8x32xf32>
    %97 = vector.extract_strided_slice %82 {offsets = [0, 96], sizes = [8, 32], strides = [1, 1]} : vector<8x128xf32> to vector<8x32xf32>
    %98 = arith.negf %97 : vector<8x32xf32>
    %99 = math.exp %98 : vector<8x32xf32>
    %cst_41 = arith.constant 1.000000e+00 : f32
    %100 = vector.broadcast %cst_41 : f32 to vector<8x32xf32>
    %101 = arith.addf %100, %99 : vector<8x32xf32>
    %102 = arith.divf %100, %101 : vector<8x32xf32>
    %103 = arith.mulf %94, %45 : vector<8x32xf32>
    %104 = arith.mulf %88, %96 : vector<8x32xf32>
    %105 = arith.addf %103, %104 : vector<8x32xf32>
    %106 = math.tanh %105 : vector<8x32xf32>
    %107 = arith.mulf %102, %106 : vector<8x32xf32>
    %c8 = arith.constant 8 : index
    %c0_42 = arith.constant 0 : index
    %108 = vector.load %arg9[%c8, %c0_42] : memref<64x32xf32, #tpu.memory_space<vmem>>, vector<8x32xf32>
    tpu.vector_store %arg9[%c8, %c0_42], %107 {strides = array<i32>} : memref<64x32xf32, #tpu.memory_space<vmem>>, vector<8x32xf32>,
    %109 = vector.extract_strided_slice %14 {offsets = [48, 0], sizes = [8, 128], strides = [1, 1]} : vector<64x128xf32> to vector<8x128xf32>
    %c0_43 = arith.constant 0 : index
    %c0_44 = arith.constant 0 : index
    %110 = vector.load %arg7[%c0_43, %c0_44] : memref<32x128xf32, #tpu.memory_space<vmem>>, vector<32x128xf32>
    %cst_45 = arith.constant dense<0.000000e+00> : vector<8x128xf32>
    %111 = tpu.matmul %77, %110, %cst_45 {dimension_numbers = #tpu.dot_dimension_numbers<[1], [0], [0], [1], [0, 0, 1, 1], [], []>} : vector<8x32xf32>, vector<32x128xf32>, vector<8x128xf32> -> vector<8x128xf32>
    %112 = arith.addf %109, %111 : vector<8x128xf32>
    %113 = vector.extract_strided_slice %112 {offsets = [0, 0], sizes = [8, 32], strides = [1, 1]} : vector<8x128xf32> to vector<8x32xf32>
    %114 = arith.negf %113 : vector<8x32xf32>
    %115 = math.exp %114 : vector<8x32xf32>
    %cst_46 = arith.constant 1.000000e+00 : f32
    %116 = vector.broadcast %cst_46 : f32 to vector<8x32xf32>
    %117 = arith.addf %116, %115 : vector<8x32xf32>
    %118 = arith.divf %116, %117 : vector<8x32xf32>
    %119 = vector.extract_strided_slice %112 {offsets = [0, 32], sizes = [8, 32], strides = [1, 1]} : vector<8x128xf32> to vector<8x32xf32>
    %120 = arith.negf %119 : vector<8x32xf32>
    %121 = math.exp %120 : vector<8x32xf32>
    %cst_47 = arith.constant 1.000000e+00 : f32
    %122 = vector.broadcast %cst_47 : f32 to vector<8x32xf32>
    %123 = arith.addf %122, %121 : vector<8x32xf32>
    %124 = arith.divf %122, %123 : vector<8x32xf32>
    %125 = vector.extract_strided_slice %112 {offsets = [0, 64], sizes = [8, 32], strides = [1, 1]} : vector<8x128xf32> to vector<8x32xf32>
    %126 = math.tanh %125 : vector<8x32xf32>
    %127 = vector.extract_strided_slice %112 {offsets = [0, 96], sizes = [8, 32], strides = [1, 1]} : vector<8x128xf32> to vector<8x32xf32>
    %128 = arith.negf %127 : vector<8x32xf32>
    %129 = math.exp %128 : vector<8x32xf32>
    %cst_48 = arith.constant 1.000000e+00 : f32
    %130 = vector.broadcast %cst_48 : f32 to vector<8x32xf32>
    %131 = arith.addf %130, %129 : vector<8x32xf32>
    %132 = arith.divf %130, %131 : vector<8x32xf32>
    %133 = arith.mulf %124, %75 : vector<8x32xf32>
    %134 = arith.mulf %118, %126 : vector<8x32xf32>
    %135 = arith.addf %133, %134 : vector<8x32xf32>
    %136 = math.tanh %135 : vector<8x32xf32>
    %137 = arith.mulf %132, %136 : vector<8x32xf32>
    %c48 = arith.constant 48 : index
    %c0_49 = arith.constant 0 : index
    %138 = vector.load %arg10[%c48, %c0_49] : memref<64x32xf32, #tpu.memory_space<vmem>>, vector<8x32xf32>
    tpu.vector_store %arg10[%c48, %c0_49], %137 {strides = array<i32>} : memref<64x32xf32, #tpu.memory_space<vmem>>, vector<8x32xf32>,
    %139 = vector.extract_strided_slice %8 {offsets = [16, 0], sizes = [8, 128], strides = [1, 1]} : vector<64x128xf32> to vector<8x128xf32>
    %c0_50 = arith.constant 0 : index
    %c0_51 = arith.constant 0 : index
    %140 = vector.load %arg4[%c0_50, %c0_51] : memref<32x128xf32, #tpu.memory_space<vmem>>, vector<32x128xf32>
    %cst_52 = arith.constant dense<0.000000e+00> : vector<8x128xf32>
    %141 = tpu.matmul %107, %140, %cst_52 {dimension_numbers = #tpu.dot_dimension_numbers<[1], [0], [0], [1], [0, 0, 1, 1], [], []>} : vector<8x32xf32>, vector<32x128xf32>, vector<8x128xf32> -> vector<8x128xf32>
    %142 = arith.addf %139, %141 : vector<8x128xf32>
    %143 = vector.extract_strided_slice %142 {offsets = [0, 0], sizes = [8, 32], strides = [1, 1]} : vector<8x128xf32> to vector<8x32xf32>
    %144 = arith.negf %143 : vector<8x32xf32>
    %145 = math.exp %144 : vector<8x32xf32>
    %cst_53 = arith.constant 1.000000e+00 : f32
    %146 = vector.broadcast %cst_53 : f32 to vector<8x32xf32>
    %147 = arith.addf %146, %145 : vector<8x32xf32>
    %148 = arith.divf %146, %147 : vector<8x32xf32>
    %149 = vector.extract_strided_slice %142 {offsets = [0, 32], sizes = [8, 32], strides = [1, 1]} : vector<8x128xf32> to vector<8x32xf32>
    %150 = arith.negf %149 : vector<8x32xf32>
    %151 = math.exp %150 : vector<8x32xf32>
    %cst_54 = arith.constant 1.000000e+00 : f32
    %152 = vector.broadcast %cst_54 : f32 to vector<8x32xf32>
    %153 = arith.addf %152, %151 : vector<8x32xf32>
    %154 = arith.divf %152, %153 : vector<8x32xf32>
    %155 = vector.extract_strided_slice %142 {offsets = [0, 64], sizes = [8, 32], strides = [1, 1]} : vector<8x128xf32> to vector<8x32xf32>
    %156 = math.tanh %155 : vector<8x32xf32>
    %157 = vector.extract_strided_slice %142 {offsets = [0, 96], sizes = [8, 32], strides = [1, 1]} : vector<8x128xf32> to vector<8x32xf32>
    %158 = arith.negf %157 : vector<8x32xf32>
    %159 = math.exp %158 : vector<8x32xf32>
    %cst_55 = arith.constant 1.000000e+00 : f32
    %160 = vector.broadcast %cst_55 : f32 to vector<8x32xf32>
    %161 = arith.addf %160, %159 : vector<8x32xf32>
    %162 = arith.divf %160, %161 : vector<8x32xf32>
    %163 = arith.mulf %154, %105 : vector<8x32xf32>
    %164 = arith.mulf %148, %156 : vector<8x32xf32>
    %165 = arith.addf %163, %164 : vector<8x32xf32>
    %166 = math.tanh %165 : vector<8x32xf32>
    %167 = arith.mulf %162, %166 : vector<8x32xf32>
    %c16 = arith.constant 16 : index
    %c0_56 = arith.constant 0 : index
    %168 = vector.load %arg9[%c16, %c0_56] : memref<64x32xf32, #tpu.memory_space<vmem>>, vector<8x32xf32>
    tpu.vector_store %arg9[%c16, %c0_56], %167 {strides = array<i32>} : memref<64x32xf32, #tpu.memory_space<vmem>>, vector<8x32xf32>,
    %169 = vector.extract_strided_slice %14 {offsets = [40, 0], sizes = [8, 128], strides = [1, 1]} : vector<64x128xf32> to vector<8x128xf32>
    %c0_57 = arith.constant 0 : index
    %c0_58 = arith.constant 0 : index
    %170 = vector.load %arg7[%c0_57, %c0_58] : memref<32x128xf32, #tpu.memory_space<vmem>>, vector<32x128xf32>
    %cst_59 = arith.constant dense<0.000000e+00> : vector<8x128xf32>
    %171 = tpu.matmul %137, %170, %cst_59 {dimension_numbers = #tpu.dot_dimension_numbers<[1], [0], [0], [1], [0, 0, 1, 1], [], []>} : vector<8x32xf32>, vector<32x128xf32>, vector<8x128xf32> -> vector<8x128xf32>
    %172 = arith.addf %169, %171 : vector<8x128xf32>
    %173 = vector.extract_strided_slice %172 {offsets = [0, 0], sizes = [8, 32], strides = [1, 1]} : vector<8x128xf32> to vector<8x32xf32>
    %174 = arith.negf %173 : vector<8x32xf32>
    %175 = math.exp %174 : vector<8x32xf32>
    %cst_60 = arith.constant 1.000000e+00 : f32
    %176 = vector.broadcast %cst_60 : f32 to vector<8x32xf32>
    %177 = arith.addf %176, %175 : vector<8x32xf32>
    %178 = arith.divf %176, %177 : vector<8x32xf32>
    %179 = vector.extract_strided_slice %172 {offsets = [0, 32], sizes = [8, 32], strides = [1, 1]} : vector<8x128xf32> to vector<8x32xf32>
    %180 = arith.negf %179 : vector<8x32xf32>
    %181 = math.exp %180 : vector<8x32xf32>
    %cst_61 = arith.constant 1.000000e+00 : f32
    %182 = vector.broadcast %cst_61 : f32 to vector<8x32xf32>
    %183 = arith.addf %182, %181 : vector<8x32xf32>
    %184 = arith.divf %182, %183 : vector<8x32xf32>
    %185 = vector.extract_strided_slice %172 {offsets = [0, 64], sizes = [8, 32], strides = [1, 1]} : vector<8x128xf32> to vector<8x32xf32>
    %186 = math.tanh %185 : vector<8x32xf32>
    %187 = vector.extract_strided_slice %172 {offsets = [0, 96], sizes = [8, 32], strides = [1, 1]} : vector<8x128xf32> to vector<8x32xf32>
    %188 = arith.negf %187 : vector<8x32xf32>
    %189 = math.exp %188 : vector<8x32xf32>
    %cst_62 = arith.constant 1.000000e+00 : f32
    %190 = vector.broadcast %cst_62 : f32 to vector<8x32xf32>
    %191 = arith.addf %190, %189 : vector<8x32xf32>
    %192 = arith.divf %190, %191 : vector<8x32xf32>
    %193 = arith.mulf %184, %135 : vector<8x32xf32>
    %194 = arith.mulf %178, %186 : vector<8x32xf32>
    %195 = arith.addf %193, %194 : vector<8x32xf32>
    %196 = math.tanh %195 : vector<8x32xf32>
    %197 = arith.mulf %192, %196 : vector<8x32xf32>
    %c40 = arith.constant 40 : index
    %c0_63 = arith.constant 0 : index
    %198 = vector.load %arg10[%c40, %c0_63] : memref<64x32xf32, #tpu.memory_space<vmem>>, vector<8x32xf32>
    tpu.vector_store %arg10[%c40, %c0_63], %197 {strides = array<i32>} : memref<64x32xf32, #tpu.memory_space<vmem>>, vector<8x32xf32>,
    %199 = vector.extract_strided_slice %8 {offsets = [24, 0], sizes = [8, 128], strides = [1, 1]} : vector<64x128xf32> to vector<8x128xf32>
    %c0_64 = arith.constant 0 : index
    %c0_65 = arith.constant 0 : index
    %200 = vector.load %arg4[%c0_64, %c0_65] : memref<32x128xf32, #tpu.memory_space<vmem>>, vector<32x128xf32>
    %cst_66 = arith.constant dense<0.000000e+00> : vector<8x128xf32>
    %201 = tpu.matmul %167, %200, %cst_66 {dimension_numbers = #tpu.dot_dimension_numbers<[1], [0], [0], [1], [0, 0, 1, 1], [], []>} : vector<8x32xf32>, vector<32x128xf32>, vector<8x128xf32> -> vector<8x128xf32>
    %202 = arith.addf %199, %201 : vector<8x128xf32>
    %203 = vector.extract_strided_slice %202 {offsets = [0, 0], sizes = [8, 32], strides = [1, 1]} : vector<8x128xf32> to vector<8x32xf32>
    %204 = arith.negf %203 : vector<8x32xf32>
    %205 = math.exp %204 : vector<8x32xf32>
    %cst_67 = arith.constant 1.000000e+00 : f32
    %206 = vector.broadcast %cst_67 : f32 to vector<8x32xf32>
    %207 = arith.addf %206, %205 : vector<8x32xf32>
    %208 = arith.divf %206, %207 : vector<8x32xf32>
    %209 = vector.extract_strided_slice %202 {offsets = [0, 32], sizes = [8, 32], strides = [1, 1]} : vector<8x128xf32> to vector<8x32xf32>
    %210 = arith.negf %209 : vector<8x32xf32>
    %211 = math.exp %210 : vector<8x32xf32>
    %cst_68 = arith.constant 1.000000e+00 : f32
    %212 = vector.broadcast %cst_68 : f32 to vector<8x32xf32>
    %213 = arith.addf %212, %211 : vector<8x32xf32>
    %214 = arith.divf %212, %213 : vector<8x32xf32>
    %215 = vector.extract_strided_slice %202 {offsets = [0, 64], sizes = [8, 32], strides = [1, 1]} : vector<8x128xf32> to vector<8x32xf32>
    %216 = math.tanh %215 : vector<8x32xf32>
    %217 = vector.extract_strided_slice %202 {offsets = [0, 96], sizes = [8, 32], strides = [1, 1]} : vector<8x128xf32> to vector<8x32xf32>
    %218 = arith.negf %217 : vector<8x32xf32>
    %219 = math.exp %218 : vector<8x32xf32>
    %cst_69 = arith.constant 1.000000e+00 : f32
    %220 = vector.broadcast %cst_69 : f32 to vector<8x32xf32>
    %221 = arith.addf %220, %219 : vector<8x32xf32>
    %222 = arith.divf %220, %221 : vector<8x32xf32>
    %223 = arith.mulf %214, %165 : vector<8x32xf32>
    %224 = arith.mulf %208, %216 : vector<8x32xf32>
    %225 = arith.addf %223, %224 : vector<8x32xf32>
    %226 = math.tanh %225 : vector<8x32xf32>
    %227 = arith.mulf %222, %226 : vector<8x32xf32>
    %c24 = arith.constant 24 : index
    %c0_70 = arith.constant 0 : index
    %228 = vector.load %arg9[%c24, %c0_70] : memref<64x32xf32, #tpu.memory_space<vmem>>, vector<8x32xf32>
    tpu.vector_store %arg9[%c24, %c0_70], %227 {strides = array<i32>} : memref<64x32xf32, #tpu.memory_space<vmem>>, vector<8x32xf32>,
    %229 = vector.extract_strided_slice %14 {offsets = [32, 0], sizes = [8, 128], strides = [1, 1]} : vector<64x128xf32> to vector<8x128xf32>
    %c0_71 = arith.constant 0 : index
    %c0_72 = arith.constant 0 : index
    %230 = vector.load %arg7[%c0_71, %c0_72] : memref<32x128xf32, #tpu.memory_space<vmem>>, vector<32x128xf32>
    %cst_73 = arith.constant dense<0.000000e+00> : vector<8x128xf32>
    %231 = tpu.matmul %197, %230, %cst_73 {dimension_numbers = #tpu.dot_dimension_numbers<[1], [0], [0], [1], [0, 0, 1, 1], [], []>} : vector<8x32xf32>, vector<32x128xf32>, vector<8x128xf32> -> vector<8x128xf32>
    %232 = arith.addf %229, %231 : vector<8x128xf32>
    %233 = vector.extract_strided_slice %232 {offsets = [0, 0], sizes = [8, 32], strides = [1, 1]} : vector<8x128xf32> to vector<8x32xf32>
    %234 = arith.negf %233 : vector<8x32xf32>
    %235 = math.exp %234 : vector<8x32xf32>
    %cst_74 = arith.constant 1.000000e+00 : f32
    %236 = vector.broadcast %cst_74 : f32 to vector<8x32xf32>
    %237 = arith.addf %236, %235 : vector<8x32xf32>
    %238 = arith.divf %236, %237 : vector<8x32xf32>
    %239 = vector.extract_strided_slice %232 {offsets = [0, 32], sizes = [8, 32], strides = [1, 1]} : vector<8x128xf32> to vector<8x32xf32>
    %240 = arith.negf %239 : vector<8x32xf32>
    %241 = math.exp %240 : vector<8x32xf32>
    %cst_75 = arith.constant 1.000000e+00 : f32
    %242 = vector.broadcast %cst_75 : f32 to vector<8x32xf32>
    %243 = arith.addf %242, %241 : vector<8x32xf32>
    %244 = arith.divf %242, %243 : vector<8x32xf32>
    %245 = vector.extract_strided_slice %232 {offsets = [0, 64], sizes = [8, 32], strides = [1, 1]} : vector<8x128xf32> to vector<8x32xf32>
    %246 = math.tanh %245 : vector<8x32xf32>
    %247 = vector.extract_strided_slice %232 {offsets = [0, 96], sizes = [8, 32], strides = [1, 1]} : vector<8x128xf32> to vector<8x32xf32>
    %248 = arith.negf %247 : vector<8x32xf32>
    %249 = math.exp %248 : vector<8x32xf32>
    %cst_76 = arith.constant 1.000000e+00 : f32
    %250 = vector.broadcast %cst_76 : f32 to vector<8x32xf32>
    %251 = arith.addf %250, %249 : vector<8x32xf32>
    %252 = arith.divf %250, %251 : vector<8x32xf32>
    %253 = arith.mulf %244, %195 : vector<8x32xf32>
    %254 = arith.mulf %238, %246 : vector<8x32xf32>
    %255 = arith.addf %253, %254 : vector<8x32xf32>
    %256 = math.tanh %255 : vector<8x32xf32>
    %257 = arith.mulf %252, %256 : vector<8x32xf32>
    %c32 = arith.constant 32 : index
    %c0_77 = arith.constant 0 : index
    %258 = vector.load %arg10[%c32, %c0_77] : memref<64x32xf32, #tpu.memory_space<vmem>>, vector<8x32xf32>
    tpu.vector_store %arg10[%c32, %c0_77], %257 {strides = array<i32>} : memref<64x32xf32, #tpu.memory_space<vmem>>, vector<8x32xf32>,
    %259 = vector.extract_strided_slice %8 {offsets = [32, 0], sizes = [8, 128], strides = [1, 1]} : vector<64x128xf32> to vector<8x128xf32>
    %c0_78 = arith.constant 0 : index
    %c0_79 = arith.constant 0 : index
    %260 = vector.load %arg4[%c0_78, %c0_79] : memref<32x128xf32, #tpu.memory_space<vmem>>, vector<32x128xf32>
    %cst_80 = arith.constant dense<0.000000e+00> : vector<8x128xf32>
    %261 = tpu.matmul %227, %260, %cst_80 {dimension_numbers = #tpu.dot_dimension_numbers<[1], [0], [0], [1], [0, 0, 1, 1], [], []>} : vector<8x32xf32>, vector<32x128xf32>, vector<8x128xf32> -> vector<8x128xf32>
    %262 = arith.addf %259, %261 : vector<8x128xf32>
    %263 = vector.extract_strided_slice %262 {offsets = [0, 0], sizes = [8, 32], strides = [1, 1]} : vector<8x128xf32> to vector<8x32xf32>
    %264 = arith.negf %263 : vector<8x32xf32>
    %265 = math.exp %264 : vector<8x32xf32>
    %cst_81 = arith.constant 1.000000e+00 : f32
    %266 = vector.broadcast %cst_81 : f32 to vector<8x32xf32>
    %267 = arith.addf %266, %265 : vector<8x32xf32>
    %268 = arith.divf %266, %267 : vector<8x32xf32>
    %269 = vector.extract_strided_slice %262 {offsets = [0, 32], sizes = [8, 32], strides = [1, 1]} : vector<8x128xf32> to vector<8x32xf32>
    %270 = arith.negf %269 : vector<8x32xf32>
    %271 = math.exp %270 : vector<8x32xf32>
    %cst_82 = arith.constant 1.000000e+00 : f32
    %272 = vector.broadcast %cst_82 : f32 to vector<8x32xf32>
    %273 = arith.addf %272, %271 : vector<8x32xf32>
    %274 = arith.divf %272, %273 : vector<8x32xf32>
    %275 = vector.extract_strided_slice %262 {offsets = [0, 64], sizes = [8, 32], strides = [1, 1]} : vector<8x128xf32> to vector<8x32xf32>
    %276 = math.tanh %275 : vector<8x32xf32>
    %277 = vector.extract_strided_slice %262 {offsets = [0, 96], sizes = [8, 32], strides = [1, 1]} : vector<8x128xf32> to vector<8x32xf32>
    %278 = arith.negf %277 : vector<8x32xf32>
    %279 = math.exp %278 : vector<8x32xf32>
    %cst_83 = arith.constant 1.000000e+00 : f32
    %280 = vector.broadcast %cst_83 : f32 to vector<8x32xf32>
    %281 = arith.addf %280, %279 : vector<8x32xf32>
    %282 = arith.divf %280, %281 : vector<8x32xf32>
    %283 = arith.mulf %274, %225 : vector<8x32xf32>
    %284 = arith.mulf %268, %276 : vector<8x32xf32>
    %285 = arith.addf %283, %284 : vector<8x32xf32>
    %286 = math.tanh %285 : vector<8x32xf32>
    %287 = arith.mulf %282, %286 : vector<8x32xf32>
    %c32_84 = arith.constant 32 : index
    %c0_85 = arith.constant 0 : index
    %288 = vector.load %arg9[%c32_84, %c0_85] : memref<64x32xf32, #tpu.memory_space<vmem>>, vector<8x32xf32>
    tpu.vector_store %arg9[%c32_84, %c0_85], %287 {strides = array<i32>} : memref<64x32xf32, #tpu.memory_space<vmem>>, vector<8x32xf32>,
    %289 = vector.extract_strided_slice %14 {offsets = [24, 0], sizes = [8, 128], strides = [1, 1]} : vector<64x128xf32> to vector<8x128xf32>
    %c0_86 = arith.constant 0 : index
    %c0_87 = arith.constant 0 : index
    %290 = vector.load %arg7[%c0_86, %c0_87] : memref<32x128xf32, #tpu.memory_space<vmem>>, vector<32x128xf32>
    %cst_88 = arith.constant dense<0.000000e+00> : vector<8x128xf32>
    %291 = tpu.matmul %257, %290, %cst_88 {dimension_numbers = #tpu.dot_dimension_numbers<[1], [0], [0], [1], [0, 0, 1, 1], [], []>} : vector<8x32xf32>, vector<32x128xf32>, vector<8x128xf32> -> vector<8x128xf32>
    %292 = arith.addf %289, %291 : vector<8x128xf32>
    %293 = vector.extract_strided_slice %292 {offsets = [0, 0], sizes = [8, 32], strides = [1, 1]} : vector<8x128xf32> to vector<8x32xf32>
    %294 = arith.negf %293 : vector<8x32xf32>
    %295 = math.exp %294 : vector<8x32xf32>
    %cst_89 = arith.constant 1.000000e+00 : f32
    %296 = vector.broadcast %cst_89 : f32 to vector<8x32xf32>
    %297 = arith.addf %296, %295 : vector<8x32xf32>
    %298 = arith.divf %296, %297 : vector<8x32xf32>
    %299 = vector.extract_strided_slice %292 {offsets = [0, 32], sizes = [8, 32], strides = [1, 1]} : vector<8x128xf32> to vector<8x32xf32>
    %300 = arith.negf %299 : vector<8x32xf32>
    %301 = math.exp %300 : vector<8x32xf32>
    %cst_90 = arith.constant 1.000000e+00 : f32
    %302 = vector.broadcast %cst_90 : f32 to vector<8x32xf32>
    %303 = arith.addf %302, %301 : vector<8x32xf32>
    %304 = arith.divf %302, %303 : vector<8x32xf32>
    %305 = vector.extract_strided_slice %292 {offsets = [0, 64], sizes = [8, 32], strides = [1, 1]} : vector<8x128xf32> to vector<8x32xf32>
    %306 = math.tanh %305 : vector<8x32xf32>
    %307 = vector.extract_strided_slice %292 {offsets = [0, 96], sizes = [8, 32], strides = [1, 1]} : vector<8x128xf32> to vector<8x32xf32>
    %308 = arith.negf %307 : vector<8x32xf32>
    %309 = math.exp %308 : vector<8x32xf32>
    %cst_91 = arith.constant 1.000000e+00 : f32
    %310 = vector.broadcast %cst_91 : f32 to vector<8x32xf32>
    %311 = arith.addf %310, %309 : vector<8x32xf32>
    %312 = arith.divf %310, %311 : vector<8x32xf32>
    %313 = arith.mulf %304, %255 : vector<8x32xf32>
    %314 = arith.mulf %298, %306 : vector<8x32xf32>
    %315 = arith.addf %313, %314 : vector<8x32xf32>
    %316 = math.tanh %315 : vector<8x32xf32>
    %317 = arith.mulf %312, %316 : vector<8x32xf32>
    %c24_92 = arith.constant 24 : index
    %c0_93 = arith.constant 0 : index
    %318 = vector.load %arg10[%c24_92, %c0_93] : memref<64x32xf32, #tpu.memory_space<vmem>>, vector<8x32xf32>
    tpu.vector_store %arg10[%c24_92, %c0_93], %317 {strides = array<i32>} : memref<64x32xf32, #tpu.memory_space<vmem>>, vector<8x32xf32>,
    %319 = vector.extract_strided_slice %8 {offsets = [40, 0], sizes = [8, 128], strides = [1, 1]} : vector<64x128xf32> to vector<8x128xf32>
    %c0_94 = arith.constant 0 : index
    %c0_95 = arith.constant 0 : index
    %320 = vector.load %arg4[%c0_94, %c0_95] : memref<32x128xf32, #tpu.memory_space<vmem>>, vector<32x128xf32>
    %cst_96 = arith.constant dense<0.000000e+00> : vector<8x128xf32>
    %321 = tpu.matmul %287, %320, %cst_96 {dimension_numbers = #tpu.dot_dimension_numbers<[1], [0], [0], [1], [0, 0, 1, 1], [], []>} : vector<8x32xf32>, vector<32x128xf32>, vector<8x128xf32> -> vector<8x128xf32>
    %322 = arith.addf %319, %321 : vector<8x128xf32>
    %323 = vector.extract_strided_slice %322 {offsets = [0, 0], sizes = [8, 32], strides = [1, 1]} : vector<8x128xf32> to vector<8x32xf32>
    %324 = arith.negf %323 : vector<8x32xf32>
    %325 = math.exp %324 : vector<8x32xf32>
    %cst_97 = arith.constant 1.000000e+00 : f32
    %326 = vector.broadcast %cst_97 : f32 to vector<8x32xf32>
    %327 = arith.addf %326, %325 : vector<8x32xf32>
    %328 = arith.divf %326, %327 : vector<8x32xf32>
    %329 = vector.extract_strided_slice %322 {offsets = [0, 32], sizes = [8, 32], strides = [1, 1]} : vector<8x128xf32> to vector<8x32xf32>
    %330 = arith.negf %329 : vector<8x32xf32>
    %331 = math.exp %330 : vector<8x32xf32>
    %cst_98 = arith.constant 1.000000e+00 : f32
    %332 = vector.broadcast %cst_98 : f32 to vector<8x32xf32>
    %333 = arith.addf %332, %331 : vector<8x32xf32>
    %334 = arith.divf %332, %333 : vector<8x32xf32>
    %335 = vector.extract_strided_slice %322 {offsets = [0, 64], sizes = [8, 32], strides = [1, 1]} : vector<8x128xf32> to vector<8x32xf32>
    %336 = math.tanh %335 : vector<8x32xf32>
    %337 = vector.extract_strided_slice %322 {offsets = [0, 96], sizes = [8, 32], strides = [1, 1]} : vector<8x128xf32> to vector<8x32xf32>
    %338 = arith.negf %337 : vector<8x32xf32>
    %339 = math.exp %338 : vector<8x32xf32>
    %cst_99 = arith.constant 1.000000e+00 : f32
    %340 = vector.broadcast %cst_99 : f32 to vector<8x32xf32>
    %341 = arith.addf %340, %339 : vector<8x32xf32>
    %342 = arith.divf %340, %341 : vector<8x32xf32>
    %343 = arith.mulf %334, %285 : vector<8x32xf32>
    %344 = arith.mulf %328, %336 : vector<8x32xf32>
    %345 = arith.addf %343, %344 : vector<8x32xf32>
    %346 = math.tanh %345 : vector<8x32xf32>
    %347 = arith.mulf %342, %346 : vector<8x32xf32>
    %c40_100 = arith.constant 40 : index
    %c0_101 = arith.constant 0 : index
    %348 = vector.load %arg9[%c40_100, %c0_101] : memref<64x32xf32, #tpu.memory_space<vmem>>, vector<8x32xf32>
    tpu.vector_store %arg9[%c40_100, %c0_101], %347 {strides = array<i32>} : memref<64x32xf32, #tpu.memory_space<vmem>>, vector<8x32xf32>,
    %349 = vector.extract_strided_slice %14 {offsets = [16, 0], sizes = [8, 128], strides = [1, 1]} : vector<64x128xf32> to vector<8x128xf32>
    %c0_102 = arith.constant 0 : index
    %c0_103 = arith.constant 0 : index
    %350 = vector.load %arg7[%c0_102, %c0_103] : memref<32x128xf32, #tpu.memory_space<vmem>>, vector<32x128xf32>
    %cst_104 = arith.constant dense<0.000000e+00> : vector<8x128xf32>
    %351 = tpu.matmul %317, %350, %cst_104 {dimension_numbers = #tpu.dot_dimension_numbers<[1], [0], [0], [1], [0, 0, 1, 1], [], []>} : vector<8x32xf32>, vector<32x128xf32>, vector<8x128xf32> -> vector<8x128xf32>
    %352 = arith.addf %349, %351 : vector<8x128xf32>
    %353 = vector.extract_strided_slice %352 {offsets = [0, 0], sizes = [8, 32], strides = [1, 1]} : vector<8x128xf32> to vector<8x32xf32>
    %354 = arith.negf %353 : vector<8x32xf32>
    %355 = math.exp %354 : vector<8x32xf32>
    %cst_105 = arith.constant 1.000000e+00 : f32
    %356 = vector.broadcast %cst_105 : f32 to vector<8x32xf32>
    %357 = arith.addf %356, %355 : vector<8x32xf32>
    %358 = arith.divf %356, %357 : vector<8x32xf32>
    %359 = vector.extract_strided_slice %352 {offsets = [0, 32], sizes = [8, 32], strides = [1, 1]} : vector<8x128xf32> to vector<8x32xf32>
    %360 = arith.negf %359 : vector<8x32xf32>
    %361 = math.exp %360 : vector<8x32xf32>
    %cst_106 = arith.constant 1.000000e+00 : f32
    %362 = vector.broadcast %cst_106 : f32 to vector<8x32xf32>
    %363 = arith.addf %362, %361 : vector<8x32xf32>
    %364 = arith.divf %362, %363 : vector<8x32xf32>
    %365 = vector.extract_strided_slice %352 {offsets = [0, 64], sizes = [8, 32], strides = [1, 1]} : vector<8x128xf32> to vector<8x32xf32>
    %366 = math.tanh %365 : vector<8x32xf32>
    %367 = vector.extract_strided_slice %352 {offsets = [0, 96], sizes = [8, 32], strides = [1, 1]} : vector<8x128xf32> to vector<8x32xf32>
    %368 = arith.negf %367 : vector<8x32xf32>
    %369 = math.exp %368 : vector<8x32xf32>
    %cst_107 = arith.constant 1.000000e+00 : f32
    %370 = vector.broadcast %cst_107 : f32 to vector<8x32xf32>
    %371 = arith.addf %370, %369 : vector<8x32xf32>
    %372 = arith.divf %370, %371 : vector<8x32xf32>
    %373 = arith.mulf %364, %315 : vector<8x32xf32>
    %374 = arith.mulf %358, %366 : vector<8x32xf32>
    %375 = arith.addf %373, %374 : vector<8x32xf32>
    %376 = math.tanh %375 : vector<8x32xf32>
    %377 = arith.mulf %372, %376 : vector<8x32xf32>
    %c16_108 = arith.constant 16 : index
    %c0_109 = arith.constant 0 : index
    %378 = vector.load %arg10[%c16_108, %c0_109] : memref<64x32xf32, #tpu.memory_space<vmem>>, vector<8x32xf32>
    tpu.vector_store %arg10[%c16_108, %c0_109], %377 {strides = array<i32>} : memref<64x32xf32, #tpu.memory_space<vmem>>, vector<8x32xf32>,
    %379 = vector.extract_strided_slice %8 {offsets = [48, 0], sizes = [8, 128], strides = [1, 1]} : vector<64x128xf32> to vector<8x128xf32>
    %c0_110 = arith.constant 0 : index
    %c0_111 = arith.constant 0 : index
    %380 = vector.load %arg4[%c0_110, %c0_111] : memref<32x128xf32, #tpu.memory_space<vmem>>, vector<32x128xf32>
    %cst_112 = arith.constant dense<0.000000e+00> : vector<8x128xf32>
    %381 = tpu.matmul %347, %380, %cst_112 {dimension_numbers = #tpu.dot_dimension_numbers<[1], [0], [0], [1], [0, 0, 1, 1], [], []>} : vector<8x32xf32>, vector<32x128xf32>, vector<8x128xf32> -> vector<8x128xf32>
    %382 = arith.addf %379, %381 : vector<8x128xf32>
    %383 = vector.extract_strided_slice %382 {offsets = [0, 0], sizes = [8, 32], strides = [1, 1]} : vector<8x128xf32> to vector<8x32xf32>
    %384 = arith.negf %383 : vector<8x32xf32>
    %385 = math.exp %384 : vector<8x32xf32>
    %cst_113 = arith.constant 1.000000e+00 : f32
    %386 = vector.broadcast %cst_113 : f32 to vector<8x32xf32>
    %387 = arith.addf %386, %385 : vector<8x32xf32>
    %388 = arith.divf %386, %387 : vector<8x32xf32>
    %389 = vector.extract_strided_slice %382 {offsets = [0, 32], sizes = [8, 32], strides = [1, 1]} : vector<8x128xf32> to vector<8x32xf32>
    %390 = arith.negf %389 : vector<8x32xf32>
    %391 = math.exp %390 : vector<8x32xf32>
    %cst_114 = arith.constant 1.000000e+00 : f32
    %392 = vector.broadcast %cst_114 : f32 to vector<8x32xf32>
    %393 = arith.addf %392, %391 : vector<8x32xf32>
    %394 = arith.divf %392, %393 : vector<8x32xf32>
    %395 = vector.extract_strided_slice %382 {offsets = [0, 64], sizes = [8, 32], strides = [1, 1]} : vector<8x128xf32> to vector<8x32xf32>
    %396 = math.tanh %395 : vector<8x32xf32>
    %397 = vector.extract_strided_slice %382 {offsets = [0, 96], sizes = [8, 32], strides = [1, 1]} : vector<8x128xf32> to vector<8x32xf32>
    %398 = arith.negf %397 : vector<8x32xf32>
    %399 = math.exp %398 : vector<8x32xf32>
    %cst_115 = arith.constant 1.000000e+00 : f32
    %400 = vector.broadcast %cst_115 : f32 to vector<8x32xf32>
    %401 = arith.addf %400, %399 : vector<8x32xf32>
    %402 = arith.divf %400, %401 : vector<8x32xf32>
    %403 = arith.mulf %394, %345 : vector<8x32xf32>
    %404 = arith.mulf %388, %396 : vector<8x32xf32>
    %405 = arith.addf %403, %404 : vector<8x32xf32>
    %406 = math.tanh %405 : vector<8x32xf32>
    %407 = arith.mulf %402, %406 : vector<8x32xf32>
    %c48_116 = arith.constant 48 : index
    %c0_117 = arith.constant 0 : index
    %408 = vector.load %arg9[%c48_116, %c0_117] : memref<64x32xf32, #tpu.memory_space<vmem>>, vector<8x32xf32>
    tpu.vector_store %arg9[%c48_116, %c0_117], %407 {strides = array<i32>} : memref<64x32xf32, #tpu.memory_space<vmem>>, vector<8x32xf32>,
    %409 = vector.extract_strided_slice %14 {offsets = [8, 0], sizes = [8, 128], strides = [1, 1]} : vector<64x128xf32> to vector<8x128xf32>
    %c0_118 = arith.constant 0 : index
    %c0_119 = arith.constant 0 : index
    %410 = vector.load %arg7[%c0_118, %c0_119] : memref<32x128xf32, #tpu.memory_space<vmem>>, vector<32x128xf32>
    %cst_120 = arith.constant dense<0.000000e+00> : vector<8x128xf32>
    %411 = tpu.matmul %377, %410, %cst_120 {dimension_numbers = #tpu.dot_dimension_numbers<[1], [0], [0], [1], [0, 0, 1, 1], [], []>} : vector<8x32xf32>, vector<32x128xf32>, vector<8x128xf32> -> vector<8x128xf32>
    %412 = arith.addf %409, %411 : vector<8x128xf32>
    %413 = vector.extract_strided_slice %412 {offsets = [0, 0], sizes = [8, 32], strides = [1, 1]} : vector<8x128xf32> to vector<8x32xf32>
    %414 = arith.negf %413 : vector<8x32xf32>
    %415 = math.exp %414 : vector<8x32xf32>
    %cst_121 = arith.constant 1.000000e+00 : f32
    %416 = vector.broadcast %cst_121 : f32 to vector<8x32xf32>
    %417 = arith.addf %416, %415 : vector<8x32xf32>
    %418 = arith.divf %416, %417 : vector<8x32xf32>
    %419 = vector.extract_strided_slice %412 {offsets = [0, 32], sizes = [8, 32], strides = [1, 1]} : vector<8x128xf32> to vector<8x32xf32>
    %420 = arith.negf %419 : vector<8x32xf32>
    %421 = math.exp %420 : vector<8x32xf32>
    %cst_122 = arith.constant 1.000000e+00 : f32
    %422 = vector.broadcast %cst_122 : f32 to vector<8x32xf32>
    %423 = arith.addf %422, %421 : vector<8x32xf32>
    %424 = arith.divf %422, %423 : vector<8x32xf32>
    %425 = vector.extract_strided_slice %412 {offsets = [0, 64], sizes = [8, 32], strides = [1, 1]} : vector<8x128xf32> to vector<8x32xf32>
    %426 = math.tanh %425 : vector<8x32xf32>
    %427 = vector.extract_strided_slice %412 {offsets = [0, 96], sizes = [8, 32], strides = [1, 1]} : vector<8x128xf32> to vector<8x32xf32>
    %428 = arith.negf %427 : vector<8x32xf32>
    %429 = math.exp %428 : vector<8x32xf32>
    %cst_123 = arith.constant 1.000000e+00 : f32
    %430 = vector.broadcast %cst_123 : f32 to vector<8x32xf32>
    %431 = arith.addf %430, %429 : vector<8x32xf32>
    %432 = arith.divf %430, %431 : vector<8x32xf32>
    %433 = arith.mulf %424, %375 : vector<8x32xf32>
    %434 = arith.mulf %418, %426 : vector<8x32xf32>
    %435 = arith.addf %433, %434 : vector<8x32xf32>
    %436 = math.tanh %435 : vector<8x32xf32>
    %437 = arith.mulf %432, %436 : vector<8x32xf32>
    %c8_124 = arith.constant 8 : index
    %c0_125 = arith.constant 0 : index
    %438 = vector.load %arg10[%c8_124, %c0_125] : memref<64x32xf32, #tpu.memory_space<vmem>>, vector<8x32xf32>
    tpu.vector_store %arg10[%c8_124, %c0_125], %437 {strides = array<i32>} : memref<64x32xf32, #tpu.memory_space<vmem>>, vector<8x32xf32>,
    %439 = vector.extract_strided_slice %8 {offsets = [56, 0], sizes = [8, 128], strides = [1, 1]} : vector<64x128xf32> to vector<8x128xf32>
    %c0_126 = arith.constant 0 : index
    %c0_127 = arith.constant 0 : index
    %440 = vector.load %arg4[%c0_126, %c0_127] : memref<32x128xf32, #tpu.memory_space<vmem>>, vector<32x128xf32>
    %cst_128 = arith.constant dense<0.000000e+00> : vector<8x128xf32>
    %441 = tpu.matmul %407, %440, %cst_128 {dimension_numbers = #tpu.dot_dimension_numbers<[1], [0], [0], [1], [0, 0, 1, 1], [], []>} : vector<8x32xf32>, vector<32x128xf32>, vector<8x128xf32> -> vector<8x128xf32>
    %442 = arith.addf %439, %441 : vector<8x128xf32>
    %443 = vector.extract_strided_slice %442 {offsets = [0, 0], sizes = [8, 32], strides = [1, 1]} : vector<8x128xf32> to vector<8x32xf32>
    %444 = arith.negf %443 : vector<8x32xf32>
    %445 = math.exp %444 : vector<8x32xf32>
    %cst_129 = arith.constant 1.000000e+00 : f32
    %446 = vector.broadcast %cst_129 : f32 to vector<8x32xf32>
    %447 = arith.addf %446, %445 : vector<8x32xf32>
    %448 = arith.divf %446, %447 : vector<8x32xf32>
    %449 = vector.extract_strided_slice %442 {offsets = [0, 32], sizes = [8, 32], strides = [1, 1]} : vector<8x128xf32> to vector<8x32xf32>
    %450 = arith.negf %449 : vector<8x32xf32>
    %451 = math.exp %450 : vector<8x32xf32>
    %cst_130 = arith.constant 1.000000e+00 : f32
    %452 = vector.broadcast %cst_130 : f32 to vector<8x32xf32>
    %453 = arith.addf %452, %451 : vector<8x32xf32>
    %454 = arith.divf %452, %453 : vector<8x32xf32>
    %455 = vector.extract_strided_slice %442 {offsets = [0, 64], sizes = [8, 32], strides = [1, 1]} : vector<8x128xf32> to vector<8x32xf32>
    %456 = math.tanh %455 : vector<8x32xf32>
    %457 = vector.extract_strided_slice %442 {offsets = [0, 96], sizes = [8, 32], strides = [1, 1]} : vector<8x128xf32> to vector<8x32xf32>
    %458 = arith.negf %457 : vector<8x32xf32>
    %459 = math.exp %458 : vector<8x32xf32>
    %cst_131 = arith.constant 1.000000e+00 : f32
    %460 = vector.broadcast %cst_131 : f32 to vector<8x32xf32>
    %461 = arith.addf %460, %459 : vector<8x32xf32>
    %462 = arith.divf %460, %461 : vector<8x32xf32>
    %463 = arith.mulf %454, %405 : vector<8x32xf32>
    %464 = arith.mulf %448, %456 : vector<8x32xf32>
    %465 = arith.addf %463, %464 : vector<8x32xf32>
    %466 = math.tanh %465 : vector<8x32xf32>
    %467 = arith.mulf %462, %466 : vector<8x32xf32>
    %c56_132 = arith.constant 56 : index
    %c0_133 = arith.constant 0 : index
    %468 = vector.load %arg9[%c56_132, %c0_133] : memref<64x32xf32, #tpu.memory_space<vmem>>, vector<8x32xf32>
    tpu.vector_store %arg9[%c56_132, %c0_133], %467 {strides = array<i32>} : memref<64x32xf32, #tpu.memory_space<vmem>>, vector<8x32xf32>,
    %469 = vector.extract_strided_slice %14 {offsets = [0, 0], sizes = [8, 128], strides = [1, 1]} : vector<64x128xf32> to vector<8x128xf32>
    %c0_134 = arith.constant 0 : index
    %c0_135 = arith.constant 0 : index
    %470 = vector.load %arg7[%c0_134, %c0_135] : memref<32x128xf32, #tpu.memory_space<vmem>>, vector<32x128xf32>
    %cst_136 = arith.constant dense<0.000000e+00> : vector<8x128xf32>
    %471 = tpu.matmul %437, %470, %cst_136 {dimension_numbers = #tpu.dot_dimension_numbers<[1], [0], [0], [1], [0, 0, 1, 1], [], []>} : vector<8x32xf32>, vector<32x128xf32>, vector<8x128xf32> -> vector<8x128xf32>
    %472 = arith.addf %469, %471 : vector<8x128xf32>
    %473 = vector.extract_strided_slice %472 {offsets = [0, 0], sizes = [8, 32], strides = [1, 1]} : vector<8x128xf32> to vector<8x32xf32>
    %474 = arith.negf %473 : vector<8x32xf32>
    %475 = math.exp %474 : vector<8x32xf32>
    %cst_137 = arith.constant 1.000000e+00 : f32
    %476 = vector.broadcast %cst_137 : f32 to vector<8x32xf32>
    %477 = arith.addf %476, %475 : vector<8x32xf32>
    %478 = arith.divf %476, %477 : vector<8x32xf32>
    %479 = vector.extract_strided_slice %472 {offsets = [0, 32], sizes = [8, 32], strides = [1, 1]} : vector<8x128xf32> to vector<8x32xf32>
    %480 = arith.negf %479 : vector<8x32xf32>
    %481 = math.exp %480 : vector<8x32xf32>
    %cst_138 = arith.constant 1.000000e+00 : f32
    %482 = vector.broadcast %cst_138 : f32 to vector<8x32xf32>
    %483 = arith.addf %482, %481 : vector<8x32xf32>
    %484 = arith.divf %482, %483 : vector<8x32xf32>
    %485 = vector.extract_strided_slice %472 {offsets = [0, 64], sizes = [8, 32], strides = [1, 1]} : vector<8x128xf32> to vector<8x32xf32>
    %486 = math.tanh %485 : vector<8x32xf32>
    %487 = vector.extract_strided_slice %472 {offsets = [0, 96], sizes = [8, 32], strides = [1, 1]} : vector<8x128xf32> to vector<8x32xf32>
    %488 = arith.negf %487 : vector<8x32xf32>
    %489 = math.exp %488 : vector<8x32xf32>
    %cst_139 = arith.constant 1.000000e+00 : f32
    %490 = vector.broadcast %cst_139 : f32 to vector<8x32xf32>
    %491 = arith.addf %490, %489 : vector<8x32xf32>
    %492 = arith.divf %490, %491 : vector<8x32xf32>
    %493 = arith.mulf %484, %435 : vector<8x32xf32>
    %494 = arith.mulf %478, %486 : vector<8x32xf32>
    %495 = arith.addf %493, %494 : vector<8x32xf32>
    %496 = math.tanh %495 : vector<8x32xf32>
    %497 = arith.mulf %492, %496 : vector<8x32xf32>
    %c0_140 = arith.constant 0 : index
    %c0_141 = arith.constant 0 : index
    %498 = vector.load %arg10[%c0_140, %c0_141] : memref<64x32xf32, #tpu.memory_space<vmem>>, vector<8x32xf32>
    tpu.vector_store %arg10[%c0_140, %c0_141], %497 {strides = array<i32>} : memref<64x32xf32, #tpu.memory_space<vmem>>, vector<8x32xf32>,
    %c0_142 = arith.constant 0 : index
    %c0_143 = arith.constant 0 : index
    %499 = vector.load %arg11[%c0_142, %c0_143] : memref<8x32xf32, #tpu.memory_space<vmem>>, vector<8x32xf32>
    tpu.vector_store %arg11[%c0_142, %c0_143], %467 {strides = array<i32>} : memref<8x32xf32, #tpu.memory_space<vmem>>, vector<8x32xf32>,
    %c0_144 = arith.constant 0 : index
    %c0_145 = arith.constant 0 : index
    %500 = vector.load %arg12[%c0_144, %c0_145] : memref<8x32xf32, #tpu.memory_space<vmem>>, vector<8x32xf32>
    tpu.vector_store %arg12[%c0_144, %c0_145], %465 {strides = array<i32>} : memref<8x32xf32, #tpu.memory_space<vmem>>, vector<8x32xf32>,
    %c0_146 = arith.constant 0 : index
    %c0_147 = arith.constant 0 : index
    %501 = vector.load %arg13[%c0_146, %c0_147] : memref<8x32xf32, #tpu.memory_space<vmem>>, vector<8x32xf32>
    tpu.vector_store %arg13[%c0_146, %c0_147], %497 {strides = array<i32>} : memref<8x32xf32, #tpu.memory_space<vmem>>, vector<8x32xf32>,
    %c0_148 = arith.constant 0 : index
    %c0_149 = arith.constant 0 : index
    %502 = vector.load %arg14[%c0_148, %c0_149] : memref<8x32xf32, #tpu.memory_space<vmem>>, vector<8x32xf32>
    tpu.vector_store %arg14[%c0_148, %c0_149], %495 {strides = array<i32>} : memref<8x32xf32, #tpu.memory_space<vmem>>, vector<8x32xf32>,
    return
  }
  func.func @transform_0(%arg0: i32) -> (i32, i32) {
    %c0_i32 = arith.constant 0 : i32
    %c0_i32_0 = arith.constant 0 : i32
    return %arg0, %c0_i32 : i32, i32
  }
  func.func @transform_1(%arg0: i32) -> (i32, i32) {
    %c0_i32 = arith.constant 0 : i32
    %0 = arith.subi %c0_i32, %arg0 : i32
    %c0_i32_0 = arith.constant 0 : i32
    %c0_i32_1 = arith.constant 0 : i32
    return %0, %c0_i32_0 : i32, i32
  }
  func.func @transform_2(%arg0: i32) -> (i32, i32) {
    %c0_i32 = arith.constant 0 : i32
    %c0_i32_0 = arith.constant 0 : i32
    %c0_i32_1 = arith.constant 0 : i32
    return %c0_i32, %c0_i32_0 : i32, i32
  }
  func.func @transform_3(%arg0: i32) -> (i32, i32) {
    %c0_i32 = arith.constant 0 : i32
    %c0_i32_0 = arith.constant 0 : i32
    %c0_i32_1 = arith.constant 0 : i32
    return %c0_i32, %c0_i32_0 : i32, i32
  }
  func.func @transform_4(%arg0: i32) -> (i32, i32) {
    %c0_i32 = arith.constant 0 : i32
    %c0_i32_0 = arith.constant 0 : i32
    %c0_i32_1 = arith.constant 0 : i32
    return %c0_i32, %c0_i32_0 : i32, i32
  }
  func.func @transform_5(%arg0: i32) -> (i32, i32) {
    %c0_i32 = arith.constant 0 : i32
    %c0_i32_0 = arith.constant 0 : i32
    %c0_i32_1 = arith.constant 0 : i32
    return %c0_i32, %c0_i32_0 : i32, i32
  }
  func.func @transform_6(%arg0: i32) -> (i32, i32) {
    %c0_i32 = arith.constant 0 : i32
    %c0_i32_0 = arith.constant 0 : i32
    %c0_i32_1 = arith.constant 0 : i32
    return %c0_i32, %c0_i32_0 : i32, i32
  }
  func.func @transform_7(%arg0: i32) -> (i32, i32) {
    %c0_i32 = arith.constant 0 : i32
    %c0_i32_0 = arith.constant 0 : i32
    %c0_i32_1 = arith.constant 0 : i32
    return %c0_i32, %c0_i32_0 : i32, i32
  }
  func.func @transform_8(%arg0: i32) -> (i32, i32) {
    %c0_i32 = arith.constant 0 : i32
    %c0_i32_0 = arith.constant 0 : i32
    return %arg0, %c0_i32 : i32, i32
  }
  func.func @transform_9(%arg0: i32) -> (i32, i32) {
    %c0_i32 = arith.constant 0 : i32
    %0 = arith.subi %c0_i32, %arg0 : i32
    %c0_i32_0 = arith.constant 0 : i32
    %c0_i32_1 = arith.constant 0 : i32
    return %0, %c0_i32_0 : i32, i32
  }
}

</mosaic_0001>

<llo_original>
// kernel: tpu_custom_call.1
$region0: #{tpu_custom_call.1}
  #allocation0 [shape = 'u32[]', space=smem, size = 0x4, offset = 0x4, fixed_abs, tag = 'smem constant byte address 0x4 - core index']
  #allocation1 [shape = 'u32[72,128]{1,0:T(1,128)}', space=vmem, size = 0x9000, scoped, tag = 'internal scratch']
  #allocation2 [shape = 'f32[8,32]{1,0:T(8,128)}', space=vmem, size = 0x1000, scoped, tag = 'scratch operand']
  #allocation3 [shape = 'f32[8,32]{1,0:T(8,128)}', space=vmem, size = 0x1000, scoped, tag = 'scratch operand']
  #allocation4 [shape = 'f32[8,32]{1,0:T(8,128)}', space=vmem, size = 0x1000, scoped, tag = 'scratch operand']
  #allocation5 [shape = 'f32[8,32]{1,0:T(8,128)}', space=vmem, size = 0x1000, scoped, tag = 'scratch operand']
  %s0 = inlined_call_operand.vmem [shape: f32[64,16], index: 0, kind: input, shape index: {}]
  %s1 = inlined_call_operand.vmem [shape: f32[64,16], index: 1, kind: input, shape index: {}]
  %s2 = inlined_call_operand.vmem [shape: f32[16,128], index: 2, kind: input, shape index: {}]
  %s3 = inlined_call_operand.vmem [shape: f32[32,128], index: 3, kind: input, shape index: {}]
  %s4 = inlined_call_operand.vmem [shape: f32[1,128], index: 4, kind: input, shape index: {}]
  %s5 = inlined_call_operand.vmem [shape: f32[16,128], index: 5, kind: input, shape index: {}]
  %s6 = inlined_call_operand.vmem [shape: f32[32,128], index: 6, kind: input, shape index: {}]
  %s7 = inlined_call_operand.vmem [shape: f32[1,128], index: 7, kind: input, shape index: {}]
  %s8 = inlined_call_operand.vmem [shape: f32[64,32], index: 8, kind: output, shape index: {0}]
  %s9 = inlined_call_operand.vmem [shape: f32[64,32], index: 9, kind: output, shape index: {1}]
  %10 = xla_tuple %s8, %s9
  %s11 = sld [smem:[#allocation0]]
  $region54: #{tpu_custom_call.1} parent=0
    _
  %s13 = ssub.s32 1, %s11
  %s14 = scalar_select 0, %s13, %s11
  // Predicated region
  $region2: #{tpu_custom_call.1} parent=0 // pred_check
    _
  $region3: #{tpu_custom_call.1} parent=0 // pred_check_branch
    %16 = sbr.rel (0) target = $region5
  $region4: #{tpu_custom_call.1} parent=0 // pred_region
    _
  $region5: #{tpu_custom_call.1} parent=0 // pred_fallthru
    _
  // Predicated region
  $region6: #{tpu_custom_call.1} parent=0 // pred_check
    _
  $region7: #{tpu_custom_call.1} parent=0 // pred_check_branch
    %18 = sbr.rel (0) target = $region9
  $region8: #{tpu_custom_call.1} parent=0 // pred_region
    %s19 = ssub.s32 0, 0
    %s20 = smul.u32 8, %s19
    %p21 = scmp.lt.s32.totalorder %s20, 7
    %s22 = scalar_select %p21, %s20, 7
    %s23 = smul.addr %s22, 8
    %s24 = scalar_lea.vmem %s1, %s23
    %s25 = ssub.s32 0, 0
    %s26 = smul.u32 8, %s25
  $region9: #{tpu_custom_call.1} parent=0 // pred_fallthru
    _
  // Predicated region
  $region10: #{tpu_custom_call.1} parent=0 // pred_check
    _
  $region11: #{tpu_custom_call.1} parent=0 // pred_check_branch
    %28 = sbr.rel (0) target = $region13
  $region12: #{tpu_custom_call.1} parent=0 // pred_region
    _
  $region13: #{tpu_custom_call.1} parent=0 // pred_fallthru
    _
  // Predicated region
  $region14: #{tpu_custom_call.1} parent=0 // pred_check
    _
  $region15: #{tpu_custom_call.1} parent=0 // pred_check_branch
    %30 = sbr.rel (0) target = $region17
  $region16: #{tpu_custom_call.1} parent=0 // pred_region
    _
  $region17: #{tpu_custom_call.1} parent=0 // pred_fallthru
    _
  // Predicated region
  $region18: #{tpu_custom_call.1} parent=0 // pred_check
    _
  $region19: #{tpu_custom_call.1} parent=0 // pred_check_branch
    %32 = sbr.rel (0) target = $region21
  $region20: #{tpu_custom_call.1} parent=0 // pred_region
    _
  $region21: #{tpu_custom_call.1} parent=0 // pred_fallthru
    _
  // Predicated region
  $region22: #{tpu_custom_call.1} parent=0 // pred_check
    _
  $region23: #{tpu_custom_call.1} parent=0 // pred_check_branch
    %34 = sbr.rel (0) target = $region25
  $region24: #{tpu_custom_call.1} parent=0 // pred_region
    _
  $region25: #{tpu_custom_call.1} parent=0 // pred_fallthru
    _
  // Predicated region
  $region26: #{tpu_custom_call.1} parent=0 // pred_check
    _
  $region27: #{tpu_custom_call.1} parent=0 // pred_check_branch
    %36 = sbr.rel (0) target = $region29
  $region28: #{tpu_custom_call.1} parent=0 // pred_region
    _
  $region29: #{tpu_custom_call.1} parent=0 // pred_fallthru
    _
  // Predicated region
  $region30: #{tpu_custom_call.1} parent=0 // pred_check
    _
  $region31: #{tpu_custom_call.1} parent=0 // pred_check_branch
    %38 = sbr.rel (0) target = $region33
  $region32: #{tpu_custom_call.1} parent=0 // pred_region
    _
  $region33: #{tpu_custom_call.1} parent=0 // pred_fallthru
    _
  %s39 = ssub.s32 0, 0
  %s40 = smul.u32 8, %s39
  %p41 = scmp.lt.s32.totalorder %s40, 7
  %s42 = scalar_select %p41, %s40, 7
  %s43 = smul.addr %s42, 8
  %s44 = scalar_lea.vmem %s1, %s43
  %s45 = ssub.s32 0, 0
  %s46 = smul.u32 8, %s45
  %p47 = scmp.lt.s32.totalorder %s46, 7
  %s48 = scalar_select %p47, %s46, 7
  %s49 = smul.addr %s48, 8
  %s50 = scalar_lea.vmem %s9, %s49
  %s51 = ssub.s32 0, 0
  %s52 = smul.u32 8, %s51
  %p53 = scmp.lt.s32.totalorder %s52, 7
  %s54 = scalar_select %p53, %s52, 7
  %s55 = smul.addr %s54, 8
  %s56 = scalar_lea.vmem %s1, %s55
  %s57 = ssub.s32 0, 0
  %s58 = smul.u32 8, %s57
  %s59 = ssub.s32 0, 0
  %s60 = smul.u32 8, %s59
  %p61 = scmp.lt.s32.totalorder %s60, 7
  %s62 = scalar_select %p61, %s60, 7
  %s63 = smul.addr %s62, 8
  %s64 = scalar_lea.vmem %s9, %s63
  %s65 = ssub.s32 0, 0
  %s66 = smul.u32 8, %s65
  %p67 = scmp.eq.s32.totalorder 0, 0
  // Predicated region
  $region34: #{tpu_custom_call.1} parent=0 // pred_check
    %p68 = pneg %p67
  $region35: #{tpu_custom_call.1} parent=0 // pred_check_branch
    %70 = sbr.rel (%p68) target = $region37
  $region36: #{tpu_custom_call.1} parent=0 // pred_region
    %vm71 = vcmask 261120
    %72 = vst.msk [vmem:[#allocation2] sm:$0xff] %vm71, 0.0
    %73 = vst.msk [vmem:[#allocation3] sm:$0xff] %vm71, 0.0
    %74 = vst.msk [vmem:[#allocation4] sm:$0xff] %vm71, 0.0
    %75 = vst.msk [vmem:[#allocation5] sm:$0xff] %vm71, 0.0
  $region37: #{tpu_custom_call.1} parent=0 // pred_fallthru
    _
  %v76 = vld [vmem:[%s0] sm:$0xff]
  %v77 = vld [vmem:[%s0 + $0x8] sm:$0xff]
  %v78 = vld [vmem:[%s0 + $0x10] sm:$0xff]
  %v79 = vld [vmem:[%s0 + $0x18] sm:$0xff]
  %v80 = vld [vmem:[%s0 + $0x20] sm:$0xff]
  %v81 = vld [vmem:[%s0 + $0x28] sm:$0xff]
  %v82 = vld [vmem:[%s0 + $0x30] sm:$0xff]
  %v83 = vld [vmem:[%s0 + $0x38] sm:$0xff]
  %v84 = vld [vmem:[%s2] sm:$0xff]
  %v85 = vld [vmem:[%s2 + $0x8] sm:$0xff]
  %v86 = vld [vmem:[%s4] sm:$0x1]
  %v88 = vperm.slane %v86, 0
  %vm90 = vcmask 130048
  %v92 = vsel %vm90, %v76, 0
  %v95 = vsel %vm90, %v77, 0
  %v98 = vsel %vm90, %v78, 0
  %v101 = vsel %vm90, %v79, 0
  %v104 = vsel %vm90, %v80, 0
  %v107 = vsel %vm90, %v81, 0
  %v110 = vsel %vm90, %v82, 0
  %v113 = vsel %vm90, %v83, 0
  %115 = vmatpush.msra.mxu0 0.0
  %116 = vmatpush.msra.mxu0 0.0
  %117 = vmatpush.msra.mxu0 0.0
  %118 = vmatpush.msra.mxu0 0.0
  %119 = vmatpush.msra.mxu0 0.0
  %120 = vmatpush.msra.mxu0 0.0
  %121 = vmatpush.msra.mxu0 0.0
  %122 = vmatpush.msra.mxu0 0.0
  %123 = vmatpush.msra.mxu0 0.0
  %124 = vmatpush.msra.mxu0 0.0
  %125 = vmatpush.msra.mxu0 0.0
  %126 = vmatpush.msra.mxu0 0.0
  %127 = vmatpush.msra.mxu0 0.0
  %128 = vmatpush.msra.mxu0 0.0
  %129 = vmatpush.msra.mxu0 %v85
  %130 = vmatpush.msra.mxu0 %v84
  %131 = vmatmul.f32.gmra.mxu0 %v92
  %v132 = vpop.f32.mrf.mxu0
  %v133 = vadd.f32 %v88, %v132
  %134 = vmatmul.f32.gmra.mxu0 %v95
  %v135 = vpop.f32.mrf.mxu0
  %v136 = vadd.f32 %v88, %v135
  %137 = vmatmul.f32.gmra.mxu0 %v98
  %v138 = vpop.f32.mrf.mxu0
  %v139 = vadd.f32 %v88, %v138
  %140 = vmatmul.f32.gmra.mxu0 %v101
  %v141 = vpop.f32.mrf.mxu0
  %v142 = vadd.f32 %v88, %v141
  %143 = vmatmul.f32.gmra.mxu0 %v104
  %v144 = vpop.f32.mrf.mxu0
  %v145 = vadd.f32 %v88, %v144
  %146 = vmatmul.f32.gmra.mxu0 %v107
  %v147 = vpop.f32.mrf.mxu0
  %v148 = vadd.f32 %v88, %v147
  %149 = vmatmul.f32.gmra.mxu0 %v110
  %v150 = vpop.f32.mrf.mxu0
  %v151 = vadd.f32 %v88, %v150
  %152 = vmatmul.f32.gmra.mxu0 %v113
  %v153 = vpop.f32.mrf.mxu0
  %v154 = vadd.f32 %v88, %v153
  %155 = vdwg.mxu0
  %v156 = vld [vmem:[%s56] sm:$0xff]
  %v157 = vld [vmem:[%s56 + $0x8] sm:$0xff]
  %v158 = vld [vmem:[%s56 + $0x10] sm:$0xff]
  %v159 = vld [vmem:[%s56 + $0x18] sm:$0xff]
  %v160 = vld [vmem:[%s56 + $0x20] sm:$0xff]
  %v161 = vld [vmem:[%s56 + $0x28] sm:$0xff]
  %v162 = vld [vmem:[%s56 + $0x30] sm:$0xff]
  %v163 = vld [vmem:[%s56 + $0x38] sm:$0xff]
  %v164 = vld [vmem:[%s5] sm:$0xff]
  %v165 = vld [vmem:[%s5 + $0x8] sm:$0xff]
  %v166 = vld [vmem:[%s7] sm:$0x1]
  %v168 = vperm.slane %v166, 0
  %v171 = vsel %vm90, %v156, 0
  %v174 = vsel %vm90, %v157, 0
  %v177 = vsel %vm90, %v158, 0
  %v180 = vsel %vm90, %v159, 0
  %v183 = vsel %vm90, %v160, 0
  %v186 = vsel %vm90, %v161, 0
  %v189 = vsel %vm90, %v162, 0
  %v192 = vsel %vm90, %v163, 0
  %194 = vmatpush.msra.mxu0 0.0
  %195 = vmatpush.msra.mxu0 0.0
  %196 = vmatpush.msra.mxu0 0.0
  %197 = vmatpush.msra.mxu0 0.0
  %198 = vmatpush.msra.mxu0 0.0
  %199 = vmatpush.msra.mxu0 0.0
  %200 = vmatpush.msra.mxu0 0.0
  %201 = vmatpush.msra.mxu0 0.0
  %202 = vmatpush.msra.mxu0 0.0
  %203 = vmatpush.msra.mxu0 0.0
  %204 = vmatpush.msra.mxu0 0.0
  %205 = vmatpush.msra.mxu0 0.0
  %206 = vmatpush.msra.mxu0 0.0
  %207 = vmatpush.msra.mxu0 0.0
  %208 = vmatpush.msra.mxu0 %v165
  %209 = vmatpush.msra.mxu0 %v164
  %210 = vmatmul.f32.gmra.mxu0 %v171
  %v211 = vpop.f32.mrf.mxu0
  %v212 = vadd.f32 %v168, %v211
  %213 = vmatmul.f32.gmra.mxu0 %v174
  %v214 = vpop.f32.mrf.mxu0
  %v215 = vadd.f32 %v168, %v214
  %216 = vmatmul.f32.gmra.mxu0 %v177
  %v217 = vpop.f32.mrf.mxu0
  %v218 = vadd.f32 %v168, %v217
  %219 = vmatmul.f32.gmra.mxu0 %v180
  %v220 = vpop.f32.mrf.mxu0
  %v221 = vadd.f32 %v168, %v220
  %222 = vmatmul.f32.gmra.mxu0 %v183
  %v223 = vpop.f32.mrf.mxu0
  %v224 = vadd.f32 %v168, %v223
  %225 = vmatmul.f32.gmra.mxu0 %v186
  %v226 = vpop.f32.mrf.mxu0
  %v227 = vadd.f32 %v168, %v226
  %228 = vmatmul.f32.gmra.mxu0 %v189
  %v229 = vpop.f32.mrf.mxu0
  %v230 = vadd.f32 %v168, %v229
  %231 = vmatmul.f32.gmra.mxu0 %v192
  %v232 = vpop.f32.mrf.mxu0
  %v233 = vadd.f32 %v168, %v232
  %234 = vdwg.mxu0
  %v235 = vld [vmem:[#allocation2] sm:$0xff]
  %v236 = vld [vmem:[#allocation3] sm:$0xff]
  %v237 = vld [vmem:[#allocation4] sm:$0xff]
  %v238 = vld [vmem:[#allocation5] sm:$0xff]
  %v239 = vld [vmem:[%s3] sm:$0xff]
  %v240 = vld [vmem:[%s3 + $0x8] sm:$0xff]
  %v241 = vld [vmem:[%s3 + $0x10] sm:$0xff]
  %v242 = vld [vmem:[%s3 + $0x18] sm:$0xff]
  %vm243 = vcmask 261120
  %v245 = vsel %vm243, %v235, 0
  %247 = vmatpush.msra.mxu0 0.0
  %248 = vmatpush.msra.mxu0 0.0
  %249 = vmatpush.msra.mxu0 0.0
  %250 = vmatpush.msra.mxu0 0.0
  %251 = vmatpush.msra.mxu0 0.0
  %252 = vmatpush.msra.mxu0 0.0
  %253 = vmatpush.msra.mxu0 0.0
  %254 = vmatpush.msra.mxu0 0.0
  %255 = vmatpush.msra.mxu0 0.0
  %256 = vmatpush.msra.mxu0 0.0
  %257 = vmatpush.msra.mxu0 0.0
  %258 = vmatpush.msra.mxu0 0.0
  %259 = vmatpush.msra.mxu0 %v242
  %260 = vmatpush.msra.mxu0 %v241
  %261 = vmatpush.msra.mxu0 %v240
  %262 = vmatpush.msra.mxu0 %v239
  %263 = vmatmul.f32.gmra.mxu0 %v245
  %v264 = vpop.f32.mrf.mxu0
  %v265 = vadd.f32 0.0, %v264
  %266 = vdwg.mxu0
  %v267 = vadd.f32 %v133, %v265
  %v268 = vxor.u32 %v267, 2147483648
  %v269 = vmul.f32 %v268, 1.442695
  %v270 = vpow.pop %v269
  %v271 = vadd.f32 %v270, 1.0
  %v272 = vrcp.pop %v271
  %v273 = vmul.f32 %v271, %v272
  %v274 = vsub.f32 1.0, %v273
  %v275 = vmul.f32 %v272, %v274
  %v276 = vadd.f32 %v272, %v275
  %vm277 = vweird.f32 %v271
  %vm278 = vweird.f32 %v272
  %vm279 = vmor %vm277, %vm278
  %v280 = vsel %vm279, %v272, %v276
  %v281 = vand.u32 2147483647, %v271
  %vm282 = vcmp.eq.f32.partialorder %v281, 8.507059e+37
  %v283 = vand.u32 %v271, 2147483648
  %v284 = vor.u32 1.1754944e-38, %v283
  %v285 = vsel %vm282, %v284, %v280
  %v286 = vmul.f32 1.0, %v285
  %v287 = vtanh.pop %v267
  %289 = vrot.lane.b32.xlu0 %v236, 32
  %v290 = vpop.permute.xlu0 %289
  %v292 = vmul.f32 %v286, %v290
  %294 = vrot.lane.b32.xlu0 %v287, 64
  %v295 = vpop.permute.xlu0 %294
  %v297 = vmul.f32 %v286, %v295
  %299 = vrot.lane.b32.xlu0 %v297, 32
  %v300 = vpop.permute.xlu0 %299
  %v302 = vadd.f32 %v292, %v300
  %v303 = vtanh.pop %v302
  %305 = vrot.lane.b32.xlu0 %v303, 64
  %v306 = vpop.permute.xlu0 %305
  %v308 = vmul.f32 %v286, %v306
  %310 = vrot.lane.b32.xlu0 %v308, 32
  %v311 = vpop.permute.xlu0 %310
  %313 = vst.msk [vmem:[%s8] sm:$0xff] %vm243, %v311
  %v314 = vld [vmem:[%s6] sm:$0xff]
  %v315 = vld [vmem:[%s6 + $0x8] sm:$0xff]
  %v316 = vld [vmem:[%s6 + $0x10] sm:$0xff]
  %v317 = vld [vmem:[%s6 + $0x18] sm:$0xff]
  %v319 = vsel %vm243, %v237, 0
  %321 = vmatpush.msra.mxu0 0.0
  %322 = vmatpush.msra.mxu0 0.0
  %323 = vmatpush.msra.mxu0 0.0
  %324 = vmatpush.msra.mxu0 0.0
  %325 = vmatpush.msra.mxu0 0.0
  %326 = vmatpush.msra.mxu0 0.0
  %327 = vmatpush.msra.mxu0 0.0
  %328 = vmatpush.msra.mxu0 0.0
  %329 = vmatpush.msra.mxu0 0.0
  %330 = vmatpush.msra.mxu0 0.0
  %331 = vmatpush.msra.mxu0 0.0
  %332 = vmatpush.msra.mxu0 0.0
  %333 = vmatpush.msra.mxu0 %v317
  %334 = vmatpush.msra.mxu0 %v316
  %335 = vmatpush.msra.mxu0 %v315
  %336 = vmatpush.msra.mxu0 %v314
  %337 = vmatmul.f32.gmra.mxu0 %v319
  %v338 = vpop.f32.mrf.mxu0
  %v339 = vadd.f32 0.0, %v338
  %340 = vdwg.mxu0
  %v341 = vadd.f32 %v233, %v339
  %v342 = vxor.u32 %v341, 2147483648
  %v343 = vmul.f32 %v342, 1.442695
  %v344 = vpow.pop %v343
  %v345 = vadd.f32 %v344, 1.0
  %v346 = vrcp.pop %v345
  %v347 = vmul.f32 %v345, %v346
  %v348 = vsub.f32 1.0, %v347
  %v349 = vmul.f32 %v346, %v348
  %v350 = vadd.f32 %v346, %v349
  %vm351 = vweird.f32 %v345
  %vm352 = vweird.f32 %v346
  %vm353 = vmor %vm351, %vm352
  %v354 = vsel %vm353, %v346, %v350
  %v355 = vand.u32 2147483647, %v345
  %vm356 = vcmp.eq.f32.partialorder %v355, 8.507059e+37
  %v357 = vand.u32 %v345, 2147483648
  %v358 = vor.u32 1.1754944e-38, %v357
  %v359 = vsel %vm356, %v358, %v354
  %v360 = vmul.f32 1.0, %v359
  %v361 = vtanh.pop %v341
  %363 = vrot.lane.b32.xlu0 %v238, 32
  %v364 = vpop.permute.xlu0 %363
  %v366 = vmul.f32 %v360, %v364
  %368 = vrot.lane.b32.xlu0 %v361, 64
  %v369 = vpop.permute.xlu0 %368
  %v371 = vmul.f32 %v360, %v369
  %373 = vrot.lane.b32.xlu0 %v371, 32
  %v374 = vpop.permute.xlu0 %373
  %v376 = vadd.f32 %v366, %v374
  %v377 = vtanh.pop %v376
  %379 = vrot.lane.b32.xlu0 %v377, 64
  %v380 = vpop.permute.xlu0 %379
  %v382 = vmul.f32 %v360, %v380
  %384 = vrot.lane.b32.xlu0 %v382, 32
  %v385 = vpop.permute.xlu0 %384
  %387 = vst.msk [vmem:[%s64 + $0x38] sm:$0xff] %vm243, %v385
  %v388 = vld [vmem:[%s3] sm:$0xff]
  %v389 = vld [vmem:[%s3 + $0x8] sm:$0xff]
  %v390 = vld [vmem:[%s3 + $0x10] sm:$0xff]
  %v391 = vld [vmem:[%s3 + $0x18] sm:$0xff]
  %v392 = vsel %vm243, %v311, 0
  %394 = vmatpush.msra.mxu0 0.0
  %395 = vmatpush.msra.mxu0 0.0
  %396 = vmatpush.msra.mxu0 0.0
  %397 = vmatpush.msra.mxu0 0.0
  %398 = vmatpush.msra.mxu0 0.0
  %399 = vmatpush.msra.mxu0 0.0
  %400 = vmatpush.msra.mxu0 0.0
  %401 = vmatpush.msra.mxu0 0.0
  %402 = vmatpush.msra.mxu0 0.0
  %403 = vmatpush.msra.mxu0 0.0
  %404 = vmatpush.msra.mxu0 0.0
  %405 = vmatpush.msra.mxu0 0.0
  %406 = vmatpush.msra.mxu0 %v391
  %407 = vmatpush.msra.mxu0 %v390
  %408 = vmatpush.msra.mxu0 %v389
  %409 = vmatpush.msra.mxu0 %v388
  %410 = vmatmul.f32.gmra.mxu0 %v392
  %v411 = vpop.f32.mrf.mxu0
  %v412 = vadd.f32 0.0, %v411
  %413 = vdwg.mxu0
  %v414 = vadd.f32 %v136, %v412
  %v415 = vxor.u32 %v414, 2147483648
  %v416 = vmul.f32 %v415, 1.442695
  %v417 = vpow.pop %v416
  %v418 = vadd.f32 %v417, 1.0
  %v419 = vrcp.pop %v418
  %v420 = vmul.f32 %v418, %v419
  %v421 = vsub.f32 1.0, %v420
  %v422 = vmul.f32 %v419, %v421
  %v423 = vadd.f32 %v419, %v422
  %vm424 = vweird.f32 %v418
  %vm425 = vweird.f32 %v419
  %vm426 = vmor %vm424, %vm425
  %v427 = vsel %vm426, %v419, %v423
  %v428 = vand.u32 2147483647, %v418
  %vm429 = vcmp.eq.f32.partialorder %v428, 8.507059e+37
  %v430 = vand.u32 %v418, 2147483648
  %v431 = vor.u32 1.1754944e-38, %v430
  %v432 = vsel %vm429, %v431, %v427
  %v433 = vmul.f32 1.0, %v432
  %v434 = vtanh.pop %v414
  %v435 = vmul.f32 %v433, %v302
  %437 = vrot.lane.b32.xlu0 %v434, 64
  %v438 = vpop.permute.xlu0 %437
  %v440 = vmul.f32 %v433, %v438
  %442 = vrot.lane.b32.xlu0 %v440, 32
  %v443 = vpop.permute.xlu0 %442
  %v445 = vadd.f32 %v435, %v443
  %v446 = vtanh.pop %v445
  %448 = vrot.lane.b32.xlu0 %v446, 64
  %v449 = vpop.permute.xlu0 %448
  %v451 = vmul.f32 %v433, %v449
  %453 = vrot.lane.b32.xlu0 %v451, 32
  %v454 = vpop.permute.xlu0 %453
  %456 = vst.msk [vmem:[%s8 + $0x8] sm:$0xff] %vm243, %v454
  %v457 = vld [vmem:[%s6] sm:$0xff]
  %v458 = vld [vmem:[%s6 + $0x8] sm:$0xff]
  %v459 = vld [vmem:[%s6 + $0x10] sm:$0xff]
  %v460 = vld [vmem:[%s6 + $0x18] sm:$0xff]
  %v461 = vsel %vm243, %v385, 0
  %463 = vmatpush.msra.mxu0 0.0
  %464 = vmatpush.msra.mxu0 0.0
  %465 = vmatpush.msra.mxu0 0.0
  %466 = vmatpush.msra.mxu0 0.0
  %467 = vmatpush.msra.mxu0 0.0
  %468 = vmatpush.msra.mxu0 0.0
  %469 = vmatpush.msra.mxu0 0.0
  %470 = vmatpush.msra.mxu0 0.0
  %471 = vmatpush.msra.mxu0 0.0
  %472 = vmatpush.msra.mxu0 0.0
  %473 = vmatpush.msra.mxu0 0.0
  %474 = vmatpush.msra.mxu0 0.0
  %475 = vmatpush.msra.mxu0 %v460
  %476 = vmatpush.msra.mxu0 %v459
  %477 = vmatpush.msra.mxu0 %v458
  %478 = vmatpush.msra.mxu0 %v457
  %479 = vmatmul.f32.gmra.mxu0 %v461
  %v480 = vpop.f32.mrf.mxu0
  %v481 = vadd.f32 0.0, %v480
  %482 = vdwg.mxu0
  %v483 = vadd.f32 %v230, %v481
  %v484 = vxor.u32 %v483, 2147483648
  %v485 = vmul.f32 %v484, 1.442695
  %v486 = vpow.pop %v485
  %v487 = vadd.f32 %v486, 1.0
  %v488 = vrcp.pop %v487
  %v489 = vmul.f32 %v487, %v488
  %v490 = vsub.f32 1.0, %v489
  %v491 = vmul.f32 %v488, %v490
  %v492 = vadd.f32 %v488, %v491
  %vm493 = vweird.f32 %v487
  %vm494 = vweird.f32 %v488
  %vm495 = vmor %vm493, %vm494
  %v496 = vsel %vm495, %v488, %v492
  %v497 = vand.u32 2147483647, %v487
  %vm498 = vcmp.eq.f32.partialorder %v497, 8.507059e+37
  %v499 = vand.u32 %v487, 2147483648
  %v500 = vor.u32 1.1754944e-38, %v499
  %v501 = vsel %vm498, %v500, %v496
  %v502 = vmul.f32 1.0, %v501
  %v503 = vtanh.pop %v483
  %v504 = vmul.f32 %v502, %v376
  %506 = vrot.lane.b32.xlu0 %v503, 64
  %v507 = vpop.permute.xlu0 %506
  %v509 = vmul.f32 %v502, %v507
  %511 = vrot.lane.b32.xlu0 %v509, 32
  %v512 = vpop.permute.xlu0 %511
  %v514 = vadd.f32 %v504, %v512
  %v515 = vtanh.pop %v514
  %517 = vrot.lane.b32.xlu0 %v515, 64
  %v518 = vpop.permute.xlu0 %517
  %v520 = vmul.f32 %v502, %v518
  %522 = vrot.lane.b32.xlu0 %v520, 32
  %v523 = vpop.permute.xlu0 %522
  %525 = vst.msk [vmem:[%s64 + $0x30] sm:$0xff] %vm243, %v523
  %v526 = vld [vmem:[%s3] sm:$0xff]
  %v527 = vld [vmem:[%s3 + $0x8] sm:$0xff]
  %v528 = vld [vmem:[%s3 + $0x10] sm:$0xff]
  %v529 = vld [vmem:[%s3 + $0x18] sm:$0xff]
  %v530 = vsel %vm243, %v454, 0
  %532 = vmatpush.msra.mxu0 0.0
  %533 = vmatpush.msra.mxu0 0.0
  %534 = vmatpush.msra.mxu0 0.0
  %535 = vmatpush.msra.mxu0 0.0
  %536 = vmatpush.msra.mxu0 0.0
  %537 = vmatpush.msra.mxu0 0.0
  %538 = vmatpush.msra.mxu0 0.0
  %539 = vmatpush.msra.mxu0 0.0
  %540 = vmatpush.msra.mxu0 0.0
  %541 = vmatpush.msra.mxu0 0.0
  %542 = vmatpush.msra.mxu0 0.0
  %543 = vmatpush.msra.mxu0 0.0
  %544 = vmatpush.msra.mxu0 %v529
  %545 = vmatpush.msra.mxu0 %v528
  %546 = vmatpush.msra.mxu0 %v527
  %547 = vmatpush.msra.mxu0 %v526
  %548 = vmatmul.f32.gmra.mxu0 %v530
  %v549 = vpop.f32.mrf.mxu0
  %v550 = vadd.f32 0.0, %v549
  %551 = vdwg.mxu0
  %v552 = vadd.f32 %v139, %v550
  %v553 = vxor.u32 %v552, 2147483648
  %v554 = vmul.f32 %v553, 1.442695
  %v555 = vpow.pop %v554
  %v556 = vadd.f32 %v555, 1.0
  %v557 = vrcp.pop %v556
  %v558 = vmul.f32 %v556, %v557
  %v559 = vsub.f32 1.0, %v558
  %v560 = vmul.f32 %v557, %v559
  %v561 = vadd.f32 %v557, %v560
  %vm562 = vweird.f32 %v556
  %vm563 = vweird.f32 %v557
  %vm564 = vmor %vm562, %vm563
  %v565 = vsel %vm564, %v557, %v561
  %v566 = vand.u32 2147483647, %v556
  %vm567 = vcmp.eq.f32.partialorder %v566, 8.507059e+37
  %v568 = vand.u32 %v556, 2147483648
  %v569 = vor.u32 1.1754944e-38, %v568
  %v570 = vsel %vm567, %v569, %v565
  %v571 = vmul.f32 1.0, %v570
  %v572 = vtanh.pop %v552
  %v573 = vmul.f32 %v571, %v445
  %575 = vrot.lane.b32.xlu0 %v572, 64
  %v576 = vpop.permute.xlu0 %575
  %v578 = vmul.f32 %v571, %v576
  %580 = vrot.lane.b32.xlu0 %v578, 32
  %v581 = vpop.permute.xlu0 %580
  %v583 = vadd.f32 %v573, %v581
  %v584 = vtanh.pop %v583
  %586 = vrot.lane.b32.xlu0 %v584, 64
  %v587 = vpop.permute.xlu0 %586
  %v589 = vmul.f32 %v571, %v587
  %591 = vrot.lane.b32.xlu0 %v589, 32
  %v592 = vpop.permute.xlu0 %591
  %594 = vst.msk [vmem:[%s8 + $0x10] sm:$0xff] %vm243, %v592
  %v595 = vld [vmem:[%s6] sm:$0xff]
  %v596 = vld [vmem:[%s6 + $0x8] sm:$0xff]
  %v597 = vld [vmem:[%s6 + $0x10] sm:$0xff]
  %v598 = vld [vmem:[%s6 + $0x18] sm:$0xff]
  %v599 = vsel %vm243, %v523, 0
  %601 = vmatpush.msra.mxu0 0.0
  %602 = vmatpush.msra.mxu0 0.0
  %603 = vmatpush.msra.mxu0 0.0
  %604 = vmatpush.msra.mxu0 0.0
  %605 = vmatpush.msra.mxu0 0.0
  %606 = vmatpush.msra.mxu0 0.0
  %607 = vmatpush.msra.mxu0 0.0
  %608 = vmatpush.msra.mxu0 0.0
  %609 = vmatpush.msra.mxu0 0.0
  %610 = vmatpush.msra.mxu0 0.0
  %611 = vmatpush.msra.mxu0 0.0
  %612 = vmatpush.msra.mxu0 0.0
  %613 = vmatpush.msra.mxu0 %v598
  %614 = vmatpush.msra.mxu0 %v597
  %615 = vmatpush.msra.mxu0 %v596
  %616 = vmatpush.msra.mxu0 %v595
  %617 = vmatmul.f32.gmra.mxu0 %v599
  %v618 = vpop.f32.mrf.mxu0
  %v619 = vadd.f32 0.0, %v618
  %620 = vdwg.mxu0
  %v621 = vadd.f32 %v227, %v619
  %v622 = vxor.u32 %v621, 2147483648
  %v623 = vmul.f32 %v622, 1.442695
  %v624 = vpow.pop %v623
  %v625 = vadd.f32 %v624, 1.0
  %v626 = vrcp.pop %v625
  %v627 = vmul.f32 %v625, %v626
  %v628 = vsub.f32 1.0, %v627
  %v629 = vmul.f32 %v626, %v628
  %v630 = vadd.f32 %v626, %v629
  %vm631 = vweird.f32 %v625
  %vm632 = vweird.f32 %v626
  %vm633 = vmor %vm631, %vm632
  %v634 = vsel %vm633, %v626, %v630
  %v635 = vand.u32 2147483647, %v625
  %vm636 = vcmp.eq.f32.partialorder %v635, 8.507059e+37
  %v637 = vand.u32 %v625, 2147483648
  %v638 = vor.u32 1.1754944e-38, %v637
  %v639 = vsel %vm636, %v638, %v634
  %v640 = vmul.f32 1.0, %v639
  %v641 = vtanh.pop %v621
  %v642 = vmul.f32 %v640, %v514
  %644 = vrot.lane.b32.xlu0 %v641, 64
  %v645 = vpop.permute.xlu0 %644
  %v647 = vmul.f32 %v640, %v645
  %649 = vrot.lane.b32.xlu0 %v647, 32
  %v650 = vpop.permute.xlu0 %649
  %v652 = vadd.f32 %v642, %v650
  %v653 = vtanh.pop %v652
  %655 = vrot.lane.b32.xlu0 %v653, 64
  %v656 = vpop.permute.xlu0 %655
  %v658 = vmul.f32 %v640, %v656
  %660 = vrot.lane.b32.xlu0 %v658, 32
  %v661 = vpop.permute.xlu0 %660
  %663 = vst.msk [vmem:[%s64 + $0x28] sm:$0xff] %vm243, %v661
  %v664 = vld [vmem:[%s3] sm:$0xff]
  %v665 = vld [vmem:[%s3 + $0x8] sm:$0xff]
  %v666 = vld [vmem:[%s3 + $0x10] sm:$0xff]
  %v667 = vld [vmem:[%s3 + $0x18] sm:$0xff]
  %v668 = vsel %vm243, %v592, 0
  %670 = vmatpush.msra.mxu0 0.0
  %671 = vmatpush.msra.mxu0 0.0
  %672 = vmatpush.msra.mxu0 0.0
  %673 = vmatpush.msra.mxu0 0.0
  %674 = vmatpush.msra.mxu0 0.0
  %675 = vmatpush.msra.mxu0 0.0
  %676 = vmatpush.msra.mxu0 0.0
  %677 = vmatpush.msra.mxu0 0.0
  %678 = vmatpush.msra.mxu0 0.0
  %679 = vmatpush.msra.mxu0 0.0
  %680 = vmatpush.msra.mxu0 0.0
  %681 = vmatpush.msra.mxu0 0.0
  %682 = vmatpush.msra.mxu0 %v667
  %683 = vmatpush.msra.mxu0 %v666
  %684 = vmatpush.msra.mxu0 %v665
  %685 = vmatpush.msra.mxu0 %v664
  %686 = vmatmul.f32.gmra.mxu0 %v668
  %v687 = vpop.f32.mrf.mxu0
  %v688 = vadd.f32 0.0, %v687
  %689 = vdwg.mxu0
  %v690 = vadd.f32 %v142, %v688
  %v691 = vxor.u32 %v690, 2147483648
  %v692 = vmul.f32 %v691, 1.442695
  %v693 = vpow.pop %v692
  %v694 = vadd.f32 %v693, 1.0
  %v695 = vrcp.pop %v694
  %v696 = vmul.f32 %v694, %v695
  %v697 = vsub.f32 1.0, %v696
  %v698 = vmul.f32 %v695, %v697
  %v699 = vadd.f32 %v695, %v698
  %vm700 = vweird.f32 %v694
  %vm701 = vweird.f32 %v695
  %vm702 = vmor %vm700, %vm701
  %v703 = vsel %vm702, %v695, %v699
  %v704 = vand.u32 2147483647, %v694
  %vm705 = vcmp.eq.f32.partialorder %v704, 8.507059e+37
  %v706 = vand.u32 %v694, 2147483648
  %v707 = vor.u32 1.1754944e-38, %v706
  %v708 = vsel %vm705, %v707, %v703
  %v709 = vmul.f32 1.0, %v708
  %v710 = vtanh.pop %v690
  %v711 = vmul.f32 %v709, %v583
  %713 = vrot.lane.b32.xlu0 %v710, 64
  %v714 = vpop.permute.xlu0 %713
  %v716 = vmul.f32 %v709, %v714
  %718 = vrot.lane.b32.xlu0 %v716, 32
  %v719 = vpop.permute.xlu0 %718
  %v721 = vadd.f32 %v711, %v719
  %v722 = vtanh.pop %v721
  %724 = vrot.lane.b32.xlu0 %v722, 64
  %v725 = vpop.permute.xlu0 %724
  %v727 = vmul.f32 %v709, %v725
  %729 = vrot.lane.b32.xlu0 %v727, 32
  %v730 = vpop.permute.xlu0 %729
  %732 = vst.msk [vmem:[%s8 + $0x18] sm:$0xff] %vm243, %v730
  %v733 = vld [vmem:[%s6] sm:$0xff]
  %v734 = vld [vmem:[%s6 + $0x8] sm:$0xff]
  %v735 = vld [vmem:[%s6 + $0x10] sm:$0xff]
  %v736 = vld [vmem:[%s6 + $0x18] sm:$0xff]
  %v737 = vsel %vm243, %v661, 0
  %739 = vmatpush.msra.mxu0 0.0
  %740 = vmatpush.msra.mxu0 0.0
  %741 = vmatpush.msra.mxu0 0.0
  %742 = vmatpush.msra.mxu0 0.0
  %743 = vmatpush.msra.mxu0 0.0
  %744 = vmatpush.msra.mxu0 0.0
  %745 = vmatpush.msra.mxu0 0.0
  %746 = vmatpush.msra.mxu0 0.0
  %747 = vmatpush.msra.mxu0 0.0
  %748 = vmatpush.msra.mxu0 0.0
  %749 = vmatpush.msra.mxu0 0.0
  %750 = vmatpush.msra.mxu0 0.0
  %751 = vmatpush.msra.mxu0 %v736
  %752 = vmatpush.msra.mxu0 %v735
  %753 = vmatpush.msra.mxu0 %v734
  %754 = vmatpush.msra.mxu0 %v733
  %755 = vmatmul.f32.gmra.mxu0 %v737
  %v756 = vpop.f32.mrf.mxu0
  %v757 = vadd.f32 0.0, %v756
  %758 = vdwg.mxu0
  %v759 = vadd.f32 %v224, %v757
  %v760 = vxor.u32 %v759, 2147483648
  %v761 = vmul.f32 %v760, 1.442695
  %v762 = vpow.pop %v761
  %v763 = vadd.f32 %v762, 1.0
  %v764 = vrcp.pop %v763
  %v765 = vmul.f32 %v763, %v764
  %v766 = vsub.f32 1.0, %v765
  %v767 = vmul.f32 %v764, %v766
  %v768 = vadd.f32 %v764, %v767
  %vm769 = vweird.f32 %v763
  %vm770 = vweird.f32 %v764
  %vm771 = vmor %vm769, %vm770
  %v772 = vsel %vm771, %v764, %v768
  %v773 = vand.u32 2147483647, %v763
  %vm774 = vcmp.eq.f32.partialorder %v773, 8.507059e+37
  %v775 = vand.u32 %v763, 2147483648
  %v776 = vor.u32 1.1754944e-38, %v775
  %v777 = vsel %vm774, %v776, %v772
  %v778 = vmul.f32 1.0, %v777
  %v779 = vtanh.pop %v759
  %v780 = vmul.f32 %v778, %v652
  %782 = vrot.lane.b32.xlu0 %v779, 64
  %v783 = vpop.permute.xlu0 %782
  %v785 = vmul.f32 %v778, %v783
  %787 = vrot.lane.b32.xlu0 %v785, 32
  %v788 = vpop.permute.xlu0 %787
  %v790 = vadd.f32 %v780, %v788
  %v791 = vtanh.pop %v790
  %793 = vrot.lane.b32.xlu0 %v791, 64
  %v794 = vpop.permute.xlu0 %793
  %v796 = vmul.f32 %v778, %v794
  %798 = vrot.lane.b32.xlu0 %v796, 32
  %v799 = vpop.permute.xlu0 %798
  %801 = vst.msk [vmem:[%s64 + $0x20] sm:$0xff] %vm243, %v799
  %v802 = vld [vmem:[%s3] sm:$0xff]
  %v803 = vld [vmem:[%s3 + $0x8] sm:$0xff]
  %v804 = vld [vmem:[%s3 + $0x10] sm:$0xff]
  %v805 = vld [vmem:[%s3 + $0x18] sm:$0xff]
  %v806 = vsel %vm243, %v730, 0
  %808 = vmatpush.msra.mxu0 0.0
  %809 = vmatpush.msra.mxu0 0.0
  %810 = vmatpush.msra.mxu0 0.0
  %811 = vmatpush.msra.mxu0 0.0
  %812 = vmatpush.msra.mxu0 0.0
  %813 = vmatpush.msra.mxu0 0.0
  %814 = vmatpush.msra.mxu0 0.0
  %815 = vmatpush.msra.mxu0 0.0
  %816 = vmatpush.msra.mxu0 0.0
  %817 = vmatpush.msra.mxu0 0.0
  %818 = vmatpush.msra.mxu0 0.0
  %819 = vmatpush.msra.mxu0 0.0
  %820 = vmatpush.msra.mxu0 %v805
  %821 = vmatpush.msra.mxu0 %v804
  %822 = vmatpush.msra.mxu0 %v803
  %823 = vmatpush.msra.mxu0 %v802
  %824 = vmatmul.f32.gmra.mxu0 %v806
  %v825 = vpop.f32.mrf.mxu0
  %v826 = vadd.f32 0.0, %v825
  %827 = vdwg.mxu0
  %v828 = vadd.f32 %v145, %v826
  %v829 = vxor.u32 %v828, 2147483648
  %v830 = vmul.f32 %v829, 1.442695
  %v831 = vpow.pop %v830
  %v832 = vadd.f32 %v831, 1.0
  %v833 = vrcp.pop %v832
  %v834 = vmul.f32 %v832, %v833
  %v835 = vsub.f32 1.0, %v834
  %v836 = vmul.f32 %v833, %v835
  %v837 = vadd.f32 %v833, %v836
  %vm838 = vweird.f32 %v832
  %vm839 = vweird.f32 %v833
  %vm840 = vmor %vm838, %vm839
  %v841 = vsel %vm840, %v833, %v837
  %v842 = vand.u32 2147483647, %v832
  %vm843 = vcmp.eq.f32.partialorder %v842, 8.507059e+37
  %v844 = vand.u32 %v832, 2147483648
  %v845 = vor.u32 1.1754944e-38, %v844
  %v846 = vsel %vm843, %v845, %v841
  %v847 = vmul.f32 1.0, %v846
  %v848 = vtanh.pop %v828
  %v849 = vmul.f32 %v847, %v721
  %851 = vrot.lane.b32.xlu0 %v848, 64
  %v852 = vpop.permute.xlu0 %851
  %v854 = vmul.f32 %v847, %v852
  %856 = vrot.lane.b32.xlu0 %v854, 32
  %v857 = vpop.permute.xlu0 %856
  %v859 = vadd.f32 %v849, %v857
  %v860 = vtanh.pop %v859
  %862 = vrot.lane.b32.xlu0 %v860, 64
  %v863 = vpop.permute.xlu0 %862
  %v865 = vmul.f32 %v847, %v863
  %867 = vrot.lane.b32.xlu0 %v865, 32
  %v868 = vpop.permute.xlu0 %867
  %870 = vst.msk [vmem:[%s8 + $0x20] sm:$0xff] %vm243, %v868
  %v871 = vld [vmem:[%s6] sm:$0xff]
  %v872 = vld [vmem:[%s6 + $0x8] sm:$0xff]
  %v873 = vld [vmem:[%s6 + $0x10] sm:$0xff]
  %v874 = vld [vmem:[%s6 + $0x18] sm:$0xff]
  %v875 = vsel %vm243, %v799, 0
  %877 = vmatpush.msra.mxu0 0.0
  %878 = vmatpush.msra.mxu0 0.0
  %879 = vmatpush.msra.mxu0 0.0
  %880 = vmatpush.msra.mxu0 0.0
  %881 = vmatpush.msra.mxu0 0.0
  %882 = vmatpush.msra.mxu0 0.0
  %883 = vmatpush.msra.mxu0 0.0
  %884 = vmatpush.msra.mxu0 0.0
  %885 = vmatpush.msra.mxu0 0.0
  %886 = vmatpush.msra.mxu0 0.0
  %887 = vmatpush.msra.mxu0 0.0
  %888 = vmatpush.msra.mxu0 0.0
  %889 = vmatpush.msra.mxu0 %v874
  %890 = vmatpush.msra.mxu0 %v873
  %891 = vmatpush.msra.mxu0 %v872
  %892 = vmatpush.msra.mxu0 %v871
  %893 = vmatmul.f32.gmra.mxu0 %v875
  %v894 = vpop.f32.mrf.mxu0
  %v895 = vadd.f32 0.0, %v894
  %896 = vdwg.mxu0
  %v897 = vadd.f32 %v221, %v895
  %v898 = vxor.u32 %v897, 2147483648
  %v899 = vmul.f32 %v898, 1.442695
  %v900 = vpow.pop %v899
  %v901 = vadd.f32 %v900, 1.0
  %v902 = vrcp.pop %v901
  %v903 = vmul.f32 %v901, %v902
  %v904 = vsub.f32 1.0, %v903
  %v905 = vmul.f32 %v902, %v904
  %v906 = vadd.f32 %v902, %v905
  %vm907 = vweird.f32 %v901
  %vm908 = vweird.f32 %v902
  %vm909 = vmor %vm907, %vm908
  %v910 = vsel %vm909, %v902, %v906
  %v911 = vand.u32 2147483647, %v901
  %vm912 = vcmp.eq.f32.partialorder %v911, 8.507059e+37
  %v913 = vand.u32 %v901, 2147483648
  %v914 = vor.u32 1.1754944e-38, %v913
  %v915 = vsel %vm912, %v914, %v910
  %v916 = vmul.f32 1.0, %v915
  %v917 = vtanh.pop %v897
  %v918 = vmul.f32 %v916, %v790
  %920 = vrot.lane.b32.xlu0 %v917, 64
  %v921 = vpop.permute.xlu0 %920
  %v923 = vmul.f32 %v916, %v921
  %925 = vrot.lane.b32.xlu0 %v923, 32
  %v926 = vpop.permute.xlu0 %925
  %v928 = vadd.f32 %v918, %v926
  %v929 = vtanh.pop %v928
  %931 = vrot.lane.b32.xlu0 %v929, 64
  %v932 = vpop.permute.xlu0 %931
  %v934 = vmul.f32 %v916, %v932
  %936 = vrot.lane.b32.xlu0 %v934, 32
  %v937 = vpop.permute.xlu0 %936
  %939 = vst.msk [vmem:[%s64 + $0x18] sm:$0xff] %vm243, %v937
  %v940 = vld [vmem:[%s3] sm:$0xff]
  %v941 = vld [vmem:[%s3 + $0x8] sm:$0xff]
  %v942 = vld [vmem:[%s3 + $0x10] sm:$0xff]
  %v943 = vld [vmem:[%s3 + $0x18] sm:$0xff]
  %v944 = vsel %vm243, %v868, 0
  %946 = vmatpush.msra.mxu0 0.0
  %947 = vmatpush.msra.mxu0 0.0
  %948 = vmatpush.msra.mxu0 0.0
  %949 = vmatpush.msra.mxu0 0.0
  %950 = vmatpush.msra.mxu0 0.0
  %951 = vmatpush.msra.mxu0 0.0
  %952 = vmatpush.msra.mxu0 0.0
  %953 = vmatpush.msra.mxu0 0.0
  %954 = vmatpush.msra.mxu0 0.0
  %955 = vmatpush.msra.mxu0 0.0
  %956 = vmatpush.msra.mxu0 0.0
  %957 = vmatpush.msra.mxu0 0.0
  %958 = vmatpush.msra.mxu0 %v943
  %959 = vmatpush.msra.mxu0 %v942
  %960 = vmatpush.msra.mxu0 %v941
  %961 = vmatpush.msra.mxu0 %v940
  %962 = vmatmul.f32.gmra.mxu0 %v944
  %v963 = vpop.f32.mrf.mxu0
  %v964 = vadd.f32 0.0, %v963
  %965 = vdwg.mxu0
  %v966 = vadd.f32 %v148, %v964
  %v967 = vxor.u32 %v966, 2147483648
  %v968 = vmul.f32 %v967, 1.442695
  %v969 = vpow.pop %v968
  %v970 = vadd.f32 %v969, 1.0
  %v971 = vrcp.pop %v970
  %v972 = vmul.f32 %v970, %v971
  %v973 = vsub.f32 1.0, %v972
  %v974 = vmul.f32 %v971, %v973
  %v975 = vadd.f32 %v971, %v974
  %vm976 = vweird.f32 %v970
  %vm977 = vweird.f32 %v971
  %vm978 = vmor %vm976, %vm977
  %v979 = vsel %vm978, %v971, %v975
  %v980 = vand.u32 2147483647, %v970
  %vm981 = vcmp.eq.f32.partialorder %v980, 8.507059e+37
  %v982 = vand.u32 %v970, 2147483648
  %v983 = vor.u32 1.1754944e-38, %v982
  %v984 = vsel %vm981, %v983, %v979
  %v985 = vmul.f32 1.0, %v984
  %v986 = vtanh.pop %v966
  %v987 = vmul.f32 %v985, %v859
  %989 = vrot.lane.b32.xlu0 %v986, 64
  %v990 = vpop.permute.xlu0 %989
  %v992 = vmul.f32 %v985, %v990
  %994 = vrot.lane.b32.xlu0 %v992, 32
  %v995 = vpop.permute.xlu0 %994
  %v997 = vadd.f32 %v987, %v995
  %v998 = vtanh.pop %v997
  %1000 = vrot.lane.b32.xlu0 %v998, 64
  %v1001 = vpop.permute.xlu0 %1000
  %v1003 = vmul.f32 %v985, %v1001
  %1005 = vrot.lane.b32.xlu0 %v1003, 32
  %v1006 = vpop.permute.xlu0 %1005
  %1008 = vst.msk [vmem:[%s8 + $0x28] sm:$0xff] %vm243, %v1006
  %v1009 = vld [vmem:[%s6] sm:$0xff]
  %v1010 = vld [vmem:[%s6 + $0x8] sm:$0xff]
  %v1011 = vld [vmem:[%s6 + $0x10] sm:$0xff]
  %v1012 = vld [vmem:[%s6 + $0x18] sm:$0xff]
  %v1013 = vsel %vm243, %v937, 0
  %1015 = vmatpush.msra.mxu0 0.0
  %1016 = vmatpush.msra.mxu0 0.0
  %1017 = vmatpush.msra.mxu0 0.0
  %1018 = vmatpush.msra.mxu0 0.0
  %1019 = vmatpush.msra.mxu0 0.0
  %1020 = vmatpush.msra.mxu0 0.0
  %1021 = vmatpush.msra.mxu0 0.0
  %1022 = vmatpush.msra.mxu0 0.0
  %1023 = vmatpush.msra.mxu0 0.0
  %1024 = vmatpush.msra.mxu0 0.0
  %1025 = vmatpush.msra.mxu0 0.0
  %1026 = vmatpush.msra.mxu0 0.0
  %1027 = vmatpush.msra.mxu0 %v1012
  %1028 = vmatpush.msra.mxu0 %v1011
  %1029 = vmatpush.msra.mxu0 %v1010
  %1030 = vmatpush.msra.mxu0 %v1009
  %1031 = vmatmul.f32.gmra.mxu0 %v1013
  %v1032 = vpop.f32.mrf.mxu0
  %v1033 = vadd.f32 0.0, %v1032
  %1034 = vdwg.mxu0
  %v1035 = vadd.f32 %v218, %v1033
  %v1036 = vxor.u32 %v1035, 2147483648
  %v1037 = vmul.f32 %v1036, 1.442695
  %v1038 = vpow.pop %v1037
  %v1039 = vadd.f32 %v1038, 1.0
  %v1040 = vrcp.pop %v1039
  %v1041 = vmul.f32 %v1039, %v1040
  %v1042 = vsub.f32 1.0, %v1041
  %v1043 = vmul.f32 %v1040, %v1042
  %v1044 = vadd.f32 %v1040, %v1043
  %vm1045 = vweird.f32 %v1039
  %vm1046 = vweird.f32 %v1040
  %vm1047 = vmor %vm1045, %vm1046
  %v1048 = vsel %vm1047, %v1040, %v1044
  %v1049 = vand.u32 2147483647, %v1039
  %vm1050 = vcmp.eq.f32.partialorder %v1049, 8.507059e+37
  %v1051 = vand.u32 %v1039, 2147483648
  %v1052 = vor.u32 1.1754944e-38, %v1051
  %v1053 = vsel %vm1050, %v1052, %v1048
  %v1054 = vmul.f32 1.0, %v1053
  %v1055 = vtanh.pop %v1035
  %v1056 = vmul.f32 %v1054, %v928
  %1058 = vrot.lane.b32.xlu0 %v1055, 64
  %v1059 = vpop.permute.xlu0 %1058
  %v1061 = vmul.f32 %v1054, %v1059
  %1063 = vrot.lane.b32.xlu0 %v1061, 32
  %v1064 = vpop.permute.xlu0 %1063
  %v1066 = vadd.f32 %v1056, %v1064
  %v1067 = vtanh.pop %v1066
  %1069 = vrot.lane.b32.xlu0 %v1067, 64
  %v1070 = vpop.permute.xlu0 %1069
  %v1072 = vmul.f32 %v1054, %v1070
  %1074 = vrot.lane.b32.xlu0 %v1072, 32
  %v1075 = vpop.permute.xlu0 %1074
  %1077 = vst.msk [vmem:[%s64 + $0x10] sm:$0xff] %vm243, %v1075
  %v1078 = vld [vmem:[%s3] sm:$0xff]
  %v1079 = vld [vmem:[%s3 + $0x8] sm:$0xff]
  %v1080 = vld [vmem:[%s3 + $0x10] sm:$0xff]
  %v1081 = vld [vmem:[%s3 + $0x18] sm:$0xff]
  %v1082 = vsel %vm243, %v1006, 0
  %1084 = vmatpush.msra.mxu0 0.0
  %1085 = vmatpush.msra.mxu0 0.0
  %1086 = vmatpush.msra.mxu0 0.0
  %1087 = vmatpush.msra.mxu0 0.0
  %1088 = vmatpush.msra.mxu0 0.0
  %1089 = vmatpush.msra.mxu0 0.0
  %1090 = vmatpush.msra.mxu0 0.0
  %1091 = vmatpush.msra.mxu0 0.0
  %1092 = vmatpush.msra.mxu0 0.0
  %1093 = vmatpush.msra.mxu0 0.0
  %1094 = vmatpush.msra.mxu0 0.0
  %1095 = vmatpush.msra.mxu0 0.0
  %1096 = vmatpush.msra.mxu0 %v1081
  %1097 = vmatpush.msra.mxu0 %v1080
  %1098 = vmatpush.msra.mxu0 %v1079
  %1099 = vmatpush.msra.mxu0 %v1078
  %1100 = vmatmul.f32.gmra.mxu0 %v1082
  %v1101 = vpop.f32.mrf.mxu0
  %v1102 = vadd.f32 0.0, %v1101
  %1103 = vdwg.mxu0
  %v1104 = vadd.f32 %v151, %v1102
  %v1105 = vxor.u32 %v1104, 2147483648
  %v1106 = vmul.f32 %v1105, 1.442695
  %v1107 = vpow.pop %v1106
  %v1108 = vadd.f32 %v1107, 1.0
  %v1109 = vrcp.pop %v1108
  %v1110 = vmul.f32 %v1108, %v1109
  %v1111 = vsub.f32 1.0, %v1110
  %v1112 = vmul.f32 %v1109, %v1111
  %v1113 = vadd.f32 %v1109, %v1112
  %vm1114 = vweird.f32 %v1108
  %vm1115 = vweird.f32 %v1109
  %vm1116 = vmor %vm1114, %vm1115
  %v1117 = vsel %vm1116, %v1109, %v1113
  %v1118 = vand.u32 2147483647, %v1108
  %vm1119 = vcmp.eq.f32.partialorder %v1118, 8.507059e+37
  %v1120 = vand.u32 %v1108, 2147483648
  %v1121 = vor.u32 1.1754944e-38, %v1120
  %v1122 = vsel %vm1119, %v1121, %v1117
  %v1123 = vmul.f32 1.0, %v1122
  %v1124 = vtanh.pop %v1104
  %v1125 = vmul.f32 %v1123, %v997
  %1127 = vrot.lane.b32.xlu0 %v1124, 64
  %v1128 = vpop.permute.xlu0 %1127
  %v1130 = vmul.f32 %v1123, %v1128
  %1132 = vrot.lane.b32.xlu0 %v1130, 32
  %v1133 = vpop.permute.xlu0 %1132
  %v1135 = vadd.f32 %v1125, %v1133
  %v1136 = vtanh.pop %v1135
  %1138 = vrot.lane.b32.xlu0 %v1136, 64
  %v1139 = vpop.permute.xlu0 %1138
  %v1141 = vmul.f32 %v1123, %v1139
  %1143 = vrot.lane.b32.xlu0 %v1141, 32
  %v1144 = vpop.permute.xlu0 %1143
  %1146 = vst.msk [vmem:[%s8 + $0x30] sm:$0xff] %vm243, %v1144
  %v1147 = vld [vmem:[%s6] sm:$0xff]
  %v1148 = vld [vmem:[%s6 + $0x8] sm:$0xff]
  %v1149 = vld [vmem:[%s6 + $0x10] sm:$0xff]
  %v1150 = vld [vmem:[%s6 + $0x18] sm:$0xff]
  %v1151 = vsel %vm243, %v1075, 0
  %1153 = vmatpush.msra.mxu0 0.0
  %1154 = vmatpush.msra.mxu0 0.0
  %1155 = vmatpush.msra.mxu0 0.0
  %1156 = vmatpush.msra.mxu0 0.0
  %1157 = vmatpush.msra.mxu0 0.0
  %1158 = vmatpush.msra.mxu0 0.0
  %1159 = vmatpush.msra.mxu0 0.0
  %1160 = vmatpush.msra.mxu0 0.0
  %1161 = vmatpush.msra.mxu0 0.0
  %1162 = vmatpush.msra.mxu0 0.0
  %1163 = vmatpush.msra.mxu0 0.0
  %1164 = vmatpush.msra.mxu0 0.0
  %1165 = vmatpush.msra.mxu0 %v1150
  %1166 = vmatpush.msra.mxu0 %v1149
  %1167 = vmatpush.msra.mxu0 %v1148
  %1168 = vmatpush.msra.mxu0 %v1147
  %1169 = vmatmul.f32.gmra.mxu0 %v1151
  %v1170 = vpop.f32.mrf.mxu0
  %v1171 = vadd.f32 0.0, %v1170
  %1172 = vdwg.mxu0
  %v1173 = vadd.f32 %v215, %v1171
  %v1174 = vxor.u32 %v1173, 2147483648
  %v1175 = vmul.f32 %v1174, 1.442695
  %v1176 = vpow.pop %v1175
  %v1177 = vadd.f32 %v1176, 1.0
  %v1178 = vrcp.pop %v1177
  %v1179 = vmul.f32 %v1177, %v1178
  %v1180 = vsub.f32 1.0, %v1179
  %v1181 = vmul.f32 %v1178, %v1180
  %v1182 = vadd.f32 %v1178, %v1181
  %vm1183 = vweird.f32 %v1177
  %vm1184 = vweird.f32 %v1178
  %vm1185 = vmor %vm1183, %vm1184
  %v1186 = vsel %vm1185, %v1178, %v1182
  %v1187 = vand.u32 2147483647, %v1177
  %vm1188 = vcmp.eq.f32.partialorder %v1187, 8.507059e+37
  %v1189 = vand.u32 %v1177, 2147483648
  %v1190 = vor.u32 1.1754944e-38, %v1189
  %v1191 = vsel %vm1188, %v1190, %v1186
  %v1192 = vmul.f32 1.0, %v1191
  %v1193 = vtanh.pop %v1173
  %v1194 = vmul.f32 %v1192, %v1066
  %1196 = vrot.lane.b32.xlu0 %v1193, 64
  %v1197 = vpop.permute.xlu0 %1196
  %v1199 = vmul.f32 %v1192, %v1197
  %1201 = vrot.lane.b32.xlu0 %v1199, 32
  %v1202 = vpop.permute.xlu0 %1201
  %v1204 = vadd.f32 %v1194, %v1202
  %v1205 = vtanh.pop %v1204
  %1207 = vrot.lane.b32.xlu0 %v1205, 64
  %v1208 = vpop.permute.xlu0 %1207
  %v1210 = vmul.f32 %v1192, %v1208
  %1212 = vrot.lane.b32.xlu0 %v1210, 32
  %v1213 = vpop.permute.xlu0 %1212
  %1215 = vst.msk [vmem:[%s64 + $0x8] sm:$0xff] %vm243, %v1213
  %v1216 = vld [vmem:[%s3] sm:$0xff]
  %v1217 = vld [vmem:[%s3 + $0x8] sm:$0xff]
  %v1218 = vld [vmem:[%s3 + $0x10] sm:$0xff]
  %v1219 = vld [vmem:[%s3 + $0x18] sm:$0xff]
  %v1220 = vsel %vm243, %v1144, 0
  %1222 = vmatpush.msra.mxu0 0.0
  %1223 = vmatpush.msra.mxu0 0.0
  %1224 = vmatpush.msra.mxu0 0.0
  %1225 = vmatpush.msra.mxu0 0.0
  %1226 = vmatpush.msra.mxu0 0.0
  %1227 = vmatpush.msra.mxu0 0.0
  %1228 = vmatpush.msra.mxu0 0.0
  %1229 = vmatpush.msra.mxu0 0.0
  %1230 = vmatpush.msra.mxu0 0.0
  %1231 = vmatpush.msra.mxu0 0.0
  %1232 = vmatpush.msra.mxu0 0.0
  %1233 = vmatpush.msra.mxu0 0.0
  %1234 = vmatpush.msra.mxu0 %v1219
  %1235 = vmatpush.msra.mxu0 %v1218
  %1236 = vmatpush.msra.mxu0 %v1217
  %1237 = vmatpush.msra.mxu0 %v1216
  %1238 = vmatmul.f32.gmra.mxu0 %v1220
  %v1239 = vpop.f32.mrf.mxu0
  %v1240 = vadd.f32 0.0, %v1239
  %1241 = vdwg.mxu0
  %v1242 = vadd.f32 %v154, %v1240
  %v1243 = vxor.u32 %v1242, 2147483648
  %v1244 = vmul.f32 %v1243, 1.442695
  %v1245 = vpow.pop %v1244
  %v1246 = vadd.f32 %v1245, 1.0
  %v1247 = vrcp.pop %v1246
  %v1248 = vmul.f32 %v1246, %v1247
  %v1249 = vsub.f32 1.0, %v1248
  %v1250 = vmul.f32 %v1247, %v1249
  %v1251 = vadd.f32 %v1247, %v1250
  %vm1252 = vweird.f32 %v1246
  %vm1253 = vweird.f32 %v1247
  %vm1254 = vmor %vm1252, %vm1253
  %v1255 = vsel %vm1254, %v1247, %v1251
  %v1256 = vand.u32 2147483647, %v1246
  %vm1257 = vcmp.eq.f32.partialorder %v1256, 8.507059e+37
  %v1258 = vand.u32 %v1246, 2147483648
  %v1259 = vor.u32 1.1754944e-38, %v1258
  %v1260 = vsel %vm1257, %v1259, %v1255
  %v1261 = vmul.f32 1.0, %v1260
  %v1262 = vtanh.pop %v1242
  %v1263 = vmul.f32 %v1261, %v1135
  %1265 = vrot.lane.b32.xlu0 %v1262, 64
  %v1266 = vpop.permute.xlu0 %1265
  %v1268 = vmul.f32 %v1261, %v1266
  %1270 = vrot.lane.b32.xlu0 %v1268, 32
  %v1271 = vpop.permute.xlu0 %1270
  %v1273 = vadd.f32 %v1263, %v1271
  %v1274 = vtanh.pop %v1273
  %1276 = vrot.lane.b32.xlu0 %v1274, 64
  %v1277 = vpop.permute.xlu0 %1276
  %v1279 = vmul.f32 %v1261, %v1277
  %1281 = vrot.lane.b32.xlu0 %v1279, 32
  %v1282 = vpop.permute.xlu0 %1281
  %1284 = vst.msk [vmem:[%s8 + $0x38] sm:$0xff] %vm243, %v1282
  %v1285 = vld [vmem:[%s6] sm:$0xff]
  %v1286 = vld [vmem:[%s6 + $0x8] sm:$0xff]
  %v1287 = vld [vmem:[%s6 + $0x10] sm:$0xff]
  %v1288 = vld [vmem:[%s6 + $0x18] sm:$0xff]
  %v1289 = vsel %vm243, %v1213, 0
  %1291 = vmatpush.msra.mxu0 0.0
  %1292 = vmatpush.msra.mxu0 0.0
  %1293 = vmatpush.msra.mxu0 0.0
  %1294 = vmatpush.msra.mxu0 0.0
  %1295 = vmatpush.msra.mxu0 0.0
  %1296 = vmatpush.msra.mxu0 0.0
  %1297 = vmatpush.msra.mxu0 0.0
  %1298 = vmatpush.msra.mxu0 0.0
  %1299 = vmatpush.msra.mxu0 0.0
  %1300 = vmatpush.msra.mxu0 0.0
  %1301 = vmatpush.msra.mxu0 0.0
  %1302 = vmatpush.msra.mxu0 0.0
  %1303 = vmatpush.msra.mxu0 %v1288
  %1304 = vmatpush.msra.mxu0 %v1287
  %1305 = vmatpush.msra.mxu0 %v1286
  %1306 = vmatpush.msra.mxu0 %v1285
  %1307 = vmatmul.f32.gmra.mxu0 %v1289
  %v1308 = vpop.f32.mrf.mxu0
  %v1309 = vadd.f32 0.0, %v1308
  %1310 = vdwg.mxu0
  %v1311 = vadd.f32 %v212, %v1309
  %v1312 = vxor.u32 %v1311, 2147483648
  %v1313 = vmul.f32 %v1312, 1.442695
  %v1314 = vpow.pop %v1313
  %v1315 = vadd.f32 %v1314, 1.0
  %v1316 = vrcp.pop %v1315
  %v1317 = vmul.f32 %v1315, %v1316
  %v1318 = vsub.f32 1.0, %v1317
  %v1319 = vmul.f32 %v1316, %v1318
  %v1320 = vadd.f32 %v1316, %v1319
  %vm1321 = vweird.f32 %v1315
  %vm1322 = vweird.f32 %v1316
  %vm1323 = vmor %vm1321, %vm1322
  %v1324 = vsel %vm1323, %v1316, %v1320
  %v1325 = vand.u32 2147483647, %v1315
  %vm1326 = vcmp.eq.f32.partialorder %v1325, 8.507059e+37
  %v1327 = vand.u32 %v1315, 2147483648
  %v1328 = vor.u32 1.1754944e-38, %v1327
  %v1329 = vsel %vm1326, %v1328, %v1324
  %v1330 = vmul.f32 1.0, %v1329
  %v1331 = vtanh.pop %v1311
  %v1332 = vmul.f32 %v1330, %v1204
  %1334 = vrot.lane.b32.xlu0 %v1331, 64
  %v1335 = vpop.permute.xlu0 %1334
  %v1337 = vmul.f32 %v1330, %v1335
  %1339 = vrot.lane.b32.xlu0 %v1337, 32
  %v1340 = vpop.permute.xlu0 %1339
  %v1342 = vadd.f32 %v1332, %v1340
  %v1343 = vtanh.pop %v1342
  %1345 = vrot.lane.b32.xlu0 %v1343, 64
  %v1346 = vpop.permute.xlu0 %1345
  %v1348 = vmul.f32 %v1330, %v1346
  %1350 = vrot.lane.b32.xlu0 %v1348, 32
  %v1351 = vpop.permute.xlu0 %1350
  %1353 = vst.msk [vmem:[%s64] sm:$0xff] %vm243, %v1351
  %1354 = vst.msk [vmem:[#allocation2] sm:$0xff] %vm243, %v1282
  %1356 = vrot.lane.b32.xlu0 %v1273, 96
  %v1357 = vpop.permute.xlu0 %1356
  %1359 = vst.msk [vmem:[#allocation3] sm:$0xff] %vm243, %v1357
  %1360 = vst.msk [vmem:[#allocation4] sm:$0xff] %vm243, %v1351
  %1362 = vrot.lane.b32.xlu0 %v1342, 96
  %v1363 = vpop.permute.xlu0 %1362
  %1365 = vst.msk [vmem:[#allocation5] sm:$0xff] %vm243, %v1363
  %s1366 = ssub.s32 0, 0
  %s1367 = smul.u32 8, %s1366
  %p1368 = scmp.lt.s32.totalorder %s1367, 7
  %s1369 = scalar_select %p1368, %s1367, 7
  %s1370 = smul.addr %s1369, 8
  %s1371 = scalar_lea.vmem %s9, %s1370
  // Predicated region
  $region38: #{tpu_custom_call.1} parent=0 // pred_check
    _
  $region39: #{tpu_custom_call.1} parent=0 // pred_check_branch
    %1373 = sbr.rel (0) target = $region41
  $region40: #{tpu_custom_call.1} parent=0 // pred_region
    _
  $region41: #{tpu_custom_call.1} parent=0 // pred_fallthru
    _
  // Predicated region
  $region42: #{tpu_custom_call.1} parent=0 // pred_check
    _
  $region43: #{tpu_custom_call.1} parent=0 // pred_check_branch
    %1375 = sbr.rel (0) target = $region45
  $region44: #{tpu_custom_call.1} parent=0 // pred_region
    %s1376 = ssub.s32 0, 0
    %s1377 = smul.u32 8, %s1376
  $region45: #{tpu_custom_call.1} parent=0 // pred_fallthru
    _
  // Predicated region
  $region46: #{tpu_custom_call.1} parent=0 // pred_check
    _
  $region47: #{tpu_custom_call.1} parent=0 // pred_check_branch
    %1379 = sbr.rel (0) target = $region49
  $region48: #{tpu_custom_call.1} parent=0 // pred_region
    _
  $region49: #{tpu_custom_call.1} parent=0 // pred_fallthru
    _
  // Predicated region
  $region50: #{tpu_custom_call.1} parent=0 // pred_check
    _
  $region51: #{tpu_custom_call.1} parent=0 // pred_check_branch
    %1381 = sbr.rel (0) target = $region53
  $region52: #{tpu_custom_call.1} parent=0 // pred_region
    %s1382 = ssub.s32 0, 0
    %s1383 = smul.u32 8, %s1382
    %p1384 = scmp.lt.s32.totalorder %s1383, 7
    %s1385 = scalar_select %p1384, %s1383, 7
    %s1386 = smul.addr %s1385, 8
    %s1387 = scalar_lea.vmem %s9, %s1386
  $region53: #{tpu_custom_call.1} parent=0 // pred_fallthru
    _

</llo_original>
